<compile_context>
chip_gen: v5e
topology: v5e:2x2
jax: 0.10.0
libtpu: 0.0.40
codegen_flags: <defaults>
</compile_context>

<pallas_src>
import functools

import jax
import jax.numpy as jnp
from jax.experimental import pallas as pl
from jax.experimental.pallas import tpu as pltpu


LANE = 128                        # TPU lane width; channel dims padded to this
_VMEM_LIMIT = 32 * 1024 * 1024    # safe on v5e/v6e/v7x (tiles here are tiny)


def _round_up(x, m):
    return (x + m - 1) // m * m


# ---------------------------------------------------------------------------
# Pallas kernels
# ---------------------------------------------------------------------------
def _matmul_bn_act_kernel(p_ref, w_ref, s_ref, b_ref, o_ref, *, use_act):
    """Fused (im2col patches) @ (weights) + BN affine + ReLU.

    p_ref: (TM, K)        bf16 im2col patch tile (streamed over the M grid axis)
    w_ref: (K, Cout_pad)  bf16 conv weights (resident across the grid)
    s_ref: (1, Cout_pad)  f32 folded BN scale  (gamma / sqrt(var + eps))
    b_ref: (1, Cout_pad)  f32 folded BN bias   (beta - mean * scale)
    o_ref: (TM, Cout_pad) f32 lane-dense output tile
    """
    acc = jnp.dot(p_ref[...], w_ref[...], preferred_element_type=jnp.float32)
    y = acc * s_ref[...] + b_ref[...]
    if use_act:
        y = jnp.maximum(y, 0.0)
    o_ref[...] = y.astype(o_ref.dtype)


def _matmul_bn_act_x2_kernel(p_ref, w1_ref, s1_ref, b1_ref,
                             w2_ref, s2_ref, b2_ref, o_ref):
    """Two chained ConvBNAct stages (stem3 3x3 conv then stem4 1x1 conv).

    The stem3 activation stays in VMEM/vregs; only the stem4 output is stored.
    Padded stem3 output channels are exactly zero (scale=bias=0 -> relu(0)=0)
    and the matching rows of w2 are zero, so padding contributes nothing.
    """
    acc1 = jnp.dot(p_ref[...], w1_ref[...], preferred_element_type=jnp.float32)
    y1 = jnp.maximum(acc1 * s1_ref[...] + b1_ref[...], 0.0)
    acc2 = jnp.dot(y1.astype(jnp.bfloat16), w2_ref[...],
                   preferred_element_type=jnp.float32)
    y2 = jnp.maximum(acc2 * s2_ref[...] + b2_ref[...], 0.0)
    o_ref[...] = y2.astype(o_ref.dtype)


def _maxpool2x2_s1_kernel(x_ref, o_ref, *, c):
    """MaxPool2d(kernel_size=2, stride=1) on one image flattened to (1, H, W*C).

    The W*C axis lives in lanes, so the four shifted-window maxes are pure
    elementwise VPU work; shifting by one W step is a +C lane offset.
    """
    ho = o_ref.shape[1]
    wc = o_ref.shape[2]                 # = Wo * C
    a = x_ref[:, 0:ho, 0:wc]
    b = x_ref[:, 0:ho, c:c + wc]        # (h,   w+1)
    e = x_ref[:, 1:ho + 1, 0:wc]        # (h+1, w)
    f = x_ref[:, 1:ho + 1, c:c + wc]    # (h+1, w+1)
    o_ref[...] = jnp.maximum(jnp.maximum(a, b), jnp.maximum(e, f))


# ---------------------------------------------------------------------------
# Glue helpers (padding, im2col, parameter packing)
# ---------------------------------------------------------------------------
def _im2col(x_bf16, kh, kw, stride, pad):
    """Return (patches (M, K) bf16, n, ho, wo).  K order = (kh, kw, cin)."""
    if pad:
        x_bf16 = jnp.pad(x_bf16, ((0, 0), (pad, pad), (pad, pad), (0, 0)))
    n, hp, wp, cin = x_bf16.shape
    ho = (hp - kh) // stride + 1
    wo = (wp - kw) // stride + 1
    m = n * ho * wo
    k = kh * kw * cin
    if kh == 1 and kw == 1 and stride == 1:
        return x_bf16.reshape(m, k), n, ho, wo
    # TODO(synk): fold patch extraction into the kernel (per-tap strided loads
    # / spatial BlockSpec with halo) to remove the kh*kw HBM read
    # amplification of materialized im2col.
    cols = []
    for i in range(kh):
        for j in range(kw):
            cols.append(
                x_bf16[:, i:i + stride * (ho - 1) + 1:stride,
                          j:j + stride * (wo - 1) + 1:stride, :])
    patches = jnp.concatenate(cols, axis=-1).reshape(m, k)
    return patches, n, ho, wo


def _pack_params(w_hwio, bn_scale, bn_bias, k_pad=None):
    """Pad weights / BN params to lane-dense (Cout multiple of 128)."""
    kh, kw, cin, cout = w_hwio.shape
    k = kh * kw * cin
    k_pad = k if k_pad is None else k_pad
    cout_p = _round_up(cout, LANE)
    wmat = jnp.zeros((k_pad, cout_p), jnp.bfloat16).at[:k, :cout].set(
        w_hwio.reshape(k, cout).astype(jnp.bfloat16))
    s_p = jnp.zeros((1, cout_p), jnp.float32).at[:, :cout].set(
        bn_scale.reshape(1, cout).astype(jnp.float32))
    b_p = jnp.zeros((1, cout_p), jnp.float32).at[:, :cout].set(
        bn_bias.reshape(1, cout).astype(jnp.float32))
    return wmat, s_p, b_p, cout_p


def _pad_m(patches, m):
    tm = min(512, _round_up(m, 16))
    m_p = _round_up(m, tm)
    if m_p != m:
        patches = jnp.pad(patches, ((0, m_p - m), (0, 0)))
    return patches, tm, m_p


# ---------------------------------------------------------------------------
# ConvBNAct wrappers
# ---------------------------------------------------------------------------
def conv_bn_act(x, w_hwio, bn_scale, bn_bias, *, stride, pad, use_act=True):
    """ConvBNAct equivalent. x: (N, H, W, Cin) f32, w_hwio: (kh, kw, Cin, Cout)."""
    kh, kw, _, cout = w_hwio.shape
    patches, n, ho, wo = _im2col(x.astype(jnp.bfloat16), kh, kw, stride, pad)
    m, k = patches.shape
    wmat, s_p, b_p, cout_p = _pack_params(w_hwio, bn_scale, bn_bias)
    patches, tm, m_p = _pad_m(patches, m)

    out = pl.pallas_call(
        functools.partial(_matmul_bn_act_kernel, use_act=use_act),
        out_shape=jax.ShapeDtypeStruct((m_p, cout_p), jnp.float32),
        grid=(m_p // tm,),
        in_specs=[
            pl.BlockSpec((tm, k), lambda i: (i, 0)),       # streamed patches
            pl.BlockSpec((k, cout_p), lambda i: (0, 0)),   # resident weights
            pl.BlockSpec((1, cout_p), lambda i: (0, 0)),   # resident BN scale
            pl.BlockSpec((1, cout_p), lambda i: (0, 0)),   # resident BN bias
        ],
        out_specs=pl.BlockSpec((tm, cout_p), lambda i: (i, 0)),
        compiler_params=pltpu.CompilerParams(
            dimension_semantics=("parallel",),
            vmem_limit_bytes=_VMEM_LIMIT),
    )(patches, wmat, s_p, b_p)

    return out[:m, :cout].reshape(n, ho, wo, cout)


def conv_bn_act_x2(x, p3, p4, *, stride, pad):
    """Fused stem3 (spatial conv) followed by stem4 (1x1 conv)."""
    w3, s3, b3 = p3
    w4, s4, b4 = p4
    kh, kw, _, cout3 = w3.shape
    cout4 = w4.shape[-1]

    patches, n, ho, wo = _im2col(x.astype(jnp.bfloat16), kh, kw, stride, pad)
    m, k = patches.shape
    w3m, s3p, b3p, cout3_p = _pack_params(w3, s3, b3)
    # w4's K dim is stem3's padded output-channel dim.
    w4m, s4p, b4p, cout4_p = _pack_params(w4, s4, b4, k_pad=cout3_p)
    patches, tm, m_p = _pad_m(patches, m)

    out = pl.pallas_call(
        _matmul_bn_act_x2_kernel,
        out_shape=jax.ShapeDtypeStruct((m_p, cout4_p), jnp.float32),
        grid=(m_p // tm,),
        in_specs=[
            pl.BlockSpec((tm, k), lambda i: (i, 0)),           # streamed patches
            pl.BlockSpec((k, cout3_p), lambda i: (0, 0)),      # stem3 weights
            pl.BlockSpec((1, cout3_p), lambda i: (0, 0)),      # stem3 BN scale
            pl.BlockSpec((1, cout3_p), lambda i: (0, 0)),      # stem3 BN bias
            pl.BlockSpec((cout3_p, cout4_p), lambda i: (0, 0)),  # stem4 weights
            pl.BlockSpec((1, cout4_p), lambda i: (0, 0)),      # stem4 BN scale
            pl.BlockSpec((1, cout4_p), lambda i: (0, 0)),      # stem4 BN bias
        ],
        out_specs=pl.BlockSpec((tm, cout4_p), lambda i: (i, 0)),
        compiler_params=pltpu.CompilerParams(
            dimension_semantics=("parallel",),
            vmem_limit_bytes=_VMEM_LIMIT),
    )(patches, w3m, s3p, b3p, w4m, s4p, b4p)

    return out[:m, :cout4].reshape(n, ho, wo, cout4)


def maxpool2x2_s1(x):
    """nn.MaxPool2d(kernel_size=2, stride=1, ceil_mode=True) on NHWC input."""
    n, h, w, c = x.shape
    ho, wo = h - 1, w - 1  # for k=2, s=1 ceil_mode never adds a partial window
    xr = x.reshape(n, h, w * c)
    out = pl.pallas_call(
        functools.partial(_maxpool2x2_s1_kernel, c=c),
        out_shape=jax.ShapeDtypeStruct((n, ho, wo * c), x.dtype),
        grid=(n,),
        in_specs=[pl.BlockSpec((1, h, w * c), lambda b: (b, 0, 0))],
        out_specs=pl.BlockSpec((1, ho, wo * c), lambda b: (b, 0, 0)),
        compiler_params=pltpu.CompilerParams(
            dimension_semantics=("parallel",),
            vmem_limit_bytes=_VMEM_LIMIT),
    )(xr)
    return out.reshape(n, ho, wo, c)


# ---------------------------------------------------------------------------
# StemBlock forward
# ---------------------------------------------------------------------------
def stem_block_forward(x_nhwc, params):
    # stem1: 3x3, stride 2, pad 1
    x = conv_bn_act(x_nhwc, *params["stem1"], stride=2, pad=1)
    # F.pad(x, (0,1,0,1)) on NCHW == pad right/bottom by 1 in NHWC
    x = jnp.pad(x, ((0, 0), (0, 1), (0, 1), (0, 0)))
    # stem2a: 2x2, stride 1, pad 0
    x2 = conv_bn_act(x, *params["stem2a"], stride=1, pad=0)
    x2 = jnp.pad(x2, ((0, 0), (0, 1), (0, 1), (0, 0)))
    # stem2b: 2x2, stride 1, pad 0
    x2 = conv_bn_act(x2, *params["stem2b"], stride=1, pad=0)
    # pool branch
    x1 = maxpool2x2_s1(x)
    # concat along channels (torch dim=1 -> NHWC last axis), order [x1, x2]
    # TODO(synk): fuse pool + concat into the stem3 patch path (two partial
    # dots into one accumulator) to avoid the intermediate HBM arrays.
    xc = jnp.concatenate([x1, x2], axis=-1)
    # stem3 (3x3, stride 2, pad 1) + stem4 (1x1) fused in one Pallas kernel.
    x = conv_bn_act_x2(xc, params["stem3"], params["stem4"], stride=2, pad=1)
    return x


# ---------------------------------------------------------------------------
# Deterministic parameter construction (synthetic; no checkpoint load)
# ---------------------------------------------------------------------------
def make_conv_bn_params(key, cin, cout, k):
    w = jax.random.normal(key, (k, k, cin, cout), jnp.float32) * 0.1  # HWIO
    idx = jnp.arange(cout, dtype=jnp.float32)
    gamma = 1.0 + 0.1 * idx
    beta = 0.05 * idx
    running_mean = 0.02 * idx
    running_var = 1.0 + 0.03 * idx
    eps = 1e-5
    scale = gamma / jnp.sqrt(running_var + eps)
    bias = beta - running_mean * scale
    return w, scale, bias


if __name__ == "__main__":
    in_chs, mid_chs, out_chs = 4, 8, 16
    key = jax.random.PRNGKey(0)
    k_x, k1, k2a, k2b, k3, k4 = jax.random.split(key, 6)

    # PyTorch-convention NCHW input, transposed to NHWC for the kernels.
    x_nchw = jax.random.normal(k_x, (2, in_chs, 16, 16), jnp.float32)
    x_nhwc = jnp.transpose(x_nchw, (0, 2, 3, 1))

    params = {
        "stem1":  make_conv_bn_params(k1,  in_chs,       mid_chs,      3),
        "stem2a": make_conv_bn_params(k2a, mid_chs,      mid_chs // 2, 2),
        "stem2b": make_conv_bn_params(k2b, mid_chs // 2, mid_chs,      2),
        "stem3":  make_conv_bn_params(k3,  mid_chs * 2,  mid_chs,      3),
        "stem4":  make_conv_bn_params(k4,  mid_chs,      out_chs,      1),
    }

    out = jax.jit(lambda x: stem_block_forward(x, params))(x_nhwc)
    out = jax.block_until_ready(out)
    # 16x16 input -> stem1 8x8 -> stem3 4x4 -> stem4 4x4, out_chs channels.
    assert out.shape == (2, 4, 4, out_chs), out.shape
    assert jnp.all(jnp.isfinite(out))
    print("KERNEL_OK")
</pallas_src>

<mosaic_0001>
module attributes {stable_mosaic.version = 11 : i64} {
  func.func @_matmul_bn_act_kernel(%arg0: i32, %arg1: memref<128x36xbf16, #tpu.memory_space<vmem>>, %arg2: memref<36x128xbf16, #tpu.memory_space<vmem>>, %arg3: memref<1x128xf32, #tpu.memory_space<vmem>>, %arg4: memref<1x128xf32, #tpu.memory_space<vmem>>, %arg5: memref<128x128xf32, #tpu.memory_space<vmem>>) attributes {dimension_semantics = [#tpu.dimension_semantics<parallel>], iteration_bounds = array<i64: 1>, scalar_prefetch = 0 : i64, scratch_operands = 0 : i64, tpu.core_type = #tpu.core_type<tc>, window_params = [{transform_indices = @transform_0, window_bounds = array<i64: 128, 36>}, {pipeline_mode = #tpu.pipeline_mode<synchronous>, transform_indices = @transform_1, window_bounds = array<i64: 36, 128>}, {pipeline_mode = #tpu.pipeline_mode<synchronous>, transform_indices = @transform_2, window_bounds = array<i64: 1, 128>}, {pipeline_mode = #tpu.pipeline_mode<synchronous>, transform_indices = @transform_3, window_bounds = array<i64: 1, 128>}, {transform_indices = @transform_4, window_bounds = array<i64: 128, 128>}]} {
    %c0 = arith.constant 0 : index
    %c0_0 = arith.constant 0 : index
    %0 = vector.load %arg1[%c0, %c0_0] : memref<128x36xbf16, #tpu.memory_space<vmem>>, vector<128x36xbf16>
    %c0_1 = arith.constant 0 : index
    %c0_2 = arith.constant 0 : index
    %1 = vector.load %arg2[%c0_1, %c0_2] : memref<36x128xbf16, #tpu.memory_space<vmem>>, vector<36x128xbf16>
    %cst = arith.constant dense<0.000000e+00> : vector<128x128xf32>
    %2 = tpu.matmul %0, %1, %cst {dimension_numbers = #tpu.dot_dimension_numbers<[1], [0], [0], [1], [0, 0, 1, 1], [], []>} : vector<128x36xbf16>, vector<36x128xbf16>, vector<128x128xf32> -> vector<128x128xf32>
    %c0_3 = arith.constant 0 : index
    %c0_4 = arith.constant 0 : index
    %3 = vector.load %arg3[%c0_3, %c0_4] : memref<1x128xf32, #tpu.memory_space<vmem>>, vector<1x128xf32>
    %4 = vector.broadcast %3 : vector<1x128xf32> to vector<128x128xf32>
    %5 = arith.mulf %2, %4 : vector<128x128xf32>
    %c0_5 = arith.constant 0 : index
    %c0_6 = arith.constant 0 : index
    %6 = vector.load %arg4[%c0_5, %c0_6] : memref<1x128xf32, #tpu.memory_space<vmem>>, vector<1x128xf32>
    %7 = vector.broadcast %6 : vector<1x128xf32> to vector<128x128xf32>
    %8 = arith.addf %5, %7 : vector<128x128xf32>
    %cst_7 = arith.constant 0.000000e+00 : f32
    %9 = vector.broadcast %cst_7 : f32 to vector<128x128xf32>
    %10 = arith.maximumf %8, %9 : vector<128x128xf32>
    %c0_8 = arith.constant 0 : index
    %c0_9 = arith.constant 0 : index
    %11 = vector.load %arg5[%c0_8, %c0_9] : memref<128x128xf32, #tpu.memory_space<vmem>>, vector<128x128xf32>
    tpu.vector_store %arg5[%c0_8, %c0_9], %10 {strides = array<i32>} : memref<128x128xf32, #tpu.memory_space<vmem>>, vector<128x128xf32>,
    return
  }
  func.func @transform_0(%arg0: i32) -> (i32, i32) {
    %c0_i32 = arith.constant 0 : i32
    %c0_i32_0 = arith.constant 0 : i32
    return %arg0, %c0_i32 : i32, i32
  }
  func.func @transform_1(%arg0: i32) -> (i32, i32) {
    %c0_i32 = arith.constant 0 : i32
    %c0_i32_0 = arith.constant 0 : i32
    %c0_i32_1 = arith.constant 0 : i32
    return %c0_i32, %c0_i32_0 : i32, i32
  }
  func.func @transform_2(%arg0: i32) -> (i32, i32) {
    %c0_i32 = arith.constant 0 : i32
    %c0_i32_0 = arith.constant 0 : i32
    %c0_i32_1 = arith.constant 0 : i32
    return %c0_i32, %c0_i32_0 : i32, i32
  }
  func.func @transform_3(%arg0: i32) -> (i32, i32) {
    %c0_i32 = arith.constant 0 : i32
    %c0_i32_0 = arith.constant 0 : i32
    %c0_i32_1 = arith.constant 0 : i32
    return %c0_i32, %c0_i32_0 : i32, i32
  }
  func.func @transform_4(%arg0: i32) -> (i32, i32) {
    %c0_i32 = arith.constant 0 : i32
    %c0_i32_0 = arith.constant 0 : i32
    return %arg0, %c0_i32 : i32, i32
  }
}

module attributes {stable_mosaic.version = 11 : i64} {
  func.func @_matmul_bn_act_kernel(%arg0: i32, %arg1: memref<128x32xbf16, #tpu.memory_space<vmem>>, %arg2: memref<32x128xbf16, #tpu.memory_space<vmem>>, %arg3: memref<1x128xf32, #tpu.memory_space<vmem>>, %arg4: memref<1x128xf32, #tpu.memory_space<vmem>>, %arg5: memref<128x128xf32, #tpu.memory_space<vmem>>) attributes {dimension_semantics = [#tpu.dimension_semantics<parallel>], iteration_bounds = array<i64: 1>, scalar_prefetch = 0 : i64, scratch_operands = 0 : i64, tpu.core_type = #tpu.core_type<tc>, window_params = [{transform_indices = @transform_0, window_bounds = array<i64: 128, 32>}, {pipeline_mode = #tpu.pipeline_mode<synchronous>, transform_indices = @transform_1, window_bounds = array<i64: 32, 128>}, {pipeline_mode = #tpu.pipeline_mode<synchronous>, transform_indices = @transform_2, window_bounds = array<i64: 1, 128>}, {pipeline_mode = #tpu.pipeline_mode<synchronous>, transform_indices = @transform_3, window_bounds = array<i64: 1, 128>}, {transform_indices = @transform_4, window_bounds = array<i64: 128, 128>}]} {
    %c0 = arith.constant 0 : index
    %c0_0 = arith.constant 0 : index
    %0 = vector.load %arg1[%c0, %c0_0] : memref<128x32xbf16, #tpu.memory_space<vmem>>, vector<128x32xbf16>
    %c0_1 = arith.constant 0 : index
    %c0_2 = arith.constant 0 : index
    %1 = vector.load %arg2[%c0_1, %c0_2] : memref<32x128xbf16, #tpu.memory_space<vmem>>, vector<32x128xbf16>
    %cst = arith.constant dense<0.000000e+00> : vector<128x128xf32>
    %2 = tpu.matmul %0, %1, %cst {dimension_numbers = #tpu.dot_dimension_numbers<[1], [0], [0], [1], [0, 0, 1, 1], [], []>} : vector<128x32xbf16>, vector<32x128xbf16>, vector<128x128xf32> -> vector<128x128xf32>
    %c0_3 = arith.constant 0 : index
    %c0_4 = arith.constant 0 : index
    %3 = vector.load %arg3[%c0_3, %c0_4] : memref<1x128xf32, #tpu.memory_space<vmem>>, vector<1x128xf32>
    %4 = vector.broadcast %3 : vector<1x128xf32> to vector<128x128xf32>
    %5 = arith.mulf %2, %4 : vector<128x128xf32>
    %c0_5 = arith.constant 0 : index
    %c0_6 = arith.constant 0 : index
    %6 = vector.load %arg4[%c0_5, %c0_6] : memref<1x128xf32, #tpu.memory_space<vmem>>, vector<1x128xf32>
    %7 = vector.broadcast %6 : vector<1x128xf32> to vector<128x128xf32>
    %8 = arith.addf %5, %7 : vector<128x128xf32>
    %cst_7 = arith.constant 0.000000e+00 : f32
    %9 = vector.broadcast %cst_7 : f32 to vector<128x128xf32>
    %10 = arith.maximumf %8, %9 : vector<128x128xf32>
    %c0_8 = arith.constant 0 : index
    %c0_9 = arith.constant 0 : index
    %11 = vector.load %arg5[%c0_8, %c0_9] : memref<128x128xf32, #tpu.memory_space<vmem>>, vector<128x128xf32>
    tpu.vector_store %arg5[%c0_8, %c0_9], %10 {strides = array<i32>} : memref<128x128xf32, #tpu.memory_space<vmem>>, vector<128x128xf32>,
    return
  }
  func.func @transform_0(%arg0: i32) -> (i32, i32) {
    %c0_i32 = arith.constant 0 : i32
    %c0_i32_0 = arith.constant 0 : i32
    return %arg0, %c0_i32 : i32, i32
  }
  func.func @transform_1(%arg0: i32) -> (i32, i32) {
    %c0_i32 = arith.constant 0 : i32
    %c0_i32_0 = arith.constant 0 : i32
    %c0_i32_1 = arith.constant 0 : i32
    return %c0_i32, %c0_i32_0 : i32, i32
  }
  func.func @transform_2(%arg0: i32) -> (i32, i32) {
    %c0_i32 = arith.constant 0 : i32
    %c0_i32_0 = arith.constant 0 : i32
    %c0_i32_1 = arith.constant 0 : i32
    return %c0_i32, %c0_i32_0 : i32, i32
  }
  func.func @transform_3(%arg0: i32) -> (i32, i32) {
    %c0_i32 = arith.constant 0 : i32
    %c0_i32_0 = arith.constant 0 : i32
    %c0_i32_1 = arith.constant 0 : i32
    return %c0_i32, %c0_i32_0 : i32, i32
  }
  func.func @transform_4(%arg0: i32) -> (i32, i32) {
    %c0_i32 = arith.constant 0 : i32
    %c0_i32_0 = arith.constant 0 : i32
    return %arg0, %c0_i32 : i32, i32
  }
}

module attributes {stable_mosaic.version = 11 : i64} {
  func.func @_matmul_bn_act_kernel(%arg0: i32, %arg1: memref<128x16xbf16, #tpu.memory_space<vmem>>, %arg2: memref<16x128xbf16, #tpu.memory_space<vmem>>, %arg3: memref<1x128xf32, #tpu.memory_space<vmem>>, %arg4: memref<1x128xf32, #tpu.memory_space<vmem>>, %arg5: memref<128x128xf32, #tpu.memory_space<vmem>>) attributes {dimension_semantics = [#tpu.dimension_semantics<parallel>], iteration_bounds = array<i64: 1>, scalar_prefetch = 0 : i64, scratch_operands = 0 : i64, tpu.core_type = #tpu.core_type<tc>, window_params = [{transform_indices = @transform_0, window_bounds = array<i64: 128, 16>}, {pipeline_mode = #tpu.pipeline_mode<synchronous>, transform_indices = @transform_1, window_bounds = array<i64: 16, 128>}, {pipeline_mode = #tpu.pipeline_mode<synchronous>, transform_indices = @transform_2, window_bounds = array<i64: 1, 128>}, {pipeline_mode = #tpu.pipeline_mode<synchronous>, transform_indices = @transform_3, window_bounds = array<i64: 1, 128>}, {transform_indices = @transform_4, window_bounds = array<i64: 128, 128>}]} {
    %c0 = arith.constant 0 : index
    %c0_0 = arith.constant 0 : index
    %0 = vector.load %arg1[%c0, %c0_0] : memref<128x16xbf16, #tpu.memory_space<vmem>>, vector<128x16xbf16>
    %c0_1 = arith.constant 0 : index
    %c0_2 = arith.constant 0 : index
    %1 = vector.load %arg2[%c0_1, %c0_2] : memref<16x128xbf16, #tpu.memory_space<vmem>>, vector<16x128xbf16>
    %cst = arith.constant dense<0.000000e+00> : vector<128x128xf32>
    %2 = tpu.matmul %0, %1, %cst {dimension_numbers = #tpu.dot_dimension_numbers<[1], [0], [0], [1], [0, 0, 1, 1], [], []>} : vector<128x16xbf16>, vector<16x128xbf16>, vector<128x128xf32> -> vector<128x128xf32>
    %c0_3 = arith.constant 0 : index
    %c0_4 = arith.constant 0 : index
    %3 = vector.load %arg3[%c0_3, %c0_4] : memref<1x128xf32, #tpu.memory_space<vmem>>, vector<1x128xf32>
    %4 = vector.broadcast %3 : vector<1x128xf32> to vector<128x128xf32>
    %5 = arith.mulf %2, %4 : vector<128x128xf32>
    %c0_5 = arith.constant 0 : index
    %c0_6 = arith.constant 0 : index
    %6 = vector.load %arg4[%c0_5, %c0_6] : memref<1x128xf32, #tpu.memory_space<vmem>>, vector<1x128xf32>
    %7 = vector.broadcast %6 : vector<1x128xf32> to vector<128x128xf32>
    %8 = arith.addf %5, %7 : vector<128x128xf32>
    %cst_7 = arith.constant 0.000000e+00 : f32
    %9 = vector.broadcast %cst_7 : f32 to vector<128x128xf32>
    %10 = arith.maximumf %8, %9 : vector<128x128xf32>
    %c0_8 = arith.constant 0 : index
    %c0_9 = arith.constant 0 : index
    %11 = vector.load %arg5[%c0_8, %c0_9] : memref<128x128xf32, #tpu.memory_space<vmem>>, vector<128x128xf32>
    tpu.vector_store %arg5[%c0_8, %c0_9], %10 {strides = array<i32>} : memref<128x128xf32, #tpu.memory_space<vmem>>, vector<128x128xf32>,
    return
  }
  func.func @transform_0(%arg0: i32) -> (i32, i32) {
    %c0_i32 = arith.constant 0 : i32
    %c0_i32_0 = arith.constant 0 : i32
    return %arg0, %c0_i32 : i32, i32
  }
  func.func @transform_1(%arg0: i32) -> (i32, i32) {
    %c0_i32 = arith.constant 0 : i32
    %c0_i32_0 = arith.constant 0 : i32
    %c0_i32_1 = arith.constant 0 : i32
    return %c0_i32, %c0_i32_0 : i32, i32
  }
  func.func @transform_2(%arg0: i32) -> (i32, i32) {
    %c0_i32 = arith.constant 0 : i32
    %c0_i32_0 = arith.constant 0 : i32
    %c0_i32_1 = arith.constant 0 : i32
    return %c0_i32, %c0_i32_0 : i32, i32
  }
  func.func @transform_3(%arg0: i32) -> (i32, i32) {
    %c0_i32 = arith.constant 0 : i32
    %c0_i32_0 = arith.constant 0 : i32
    %c0_i32_1 = arith.constant 0 : i32
    return %c0_i32, %c0_i32_0 : i32, i32
  }
  func.func @transform_4(%arg0: i32) -> (i32, i32) {
    %c0_i32 = arith.constant 0 : i32
    %c0_i32_0 = arith.constant 0 : i32
    return %arg0, %c0_i32 : i32, i32
  }
}

module attributes {stable_mosaic.version = 11 : i64} {
  func.func @_maxpool2x2_s1_kernel(%arg0: i32, %arg1: memref<1x9x72xf32, #tpu.memory_space<vmem>>, %arg2: memref<1x8x64xf32, #tpu.memory_space<vmem>>) attributes {dimension_semantics = [#tpu.dimension_semantics<parallel>], iteration_bounds = array<i64: 2>, scalar_prefetch = 0 : i64, scratch_operands = 0 : i64, tpu.core_type = #tpu.core_type<tc>, window_params = [{transform_indices = @transform_0, window_bounds = array<i64: 1, 9, 72>}, {transform_indices = @transform_1, window_bounds = array<i64: 1, 8, 64>}]} {
    %c0 = arith.constant 0 : index
    %c0_0 = arith.constant 0 : index
    %c0_1 = arith.constant 0 : index
    %0 = vector.load %arg1[%c0, %c0_0, %c0_1] : memref<1x9x72xf32, #tpu.memory_space<vmem>>, vector<1x8x64xf32>
    %c0_2 = arith.constant 0 : index
    %c0_3 = arith.constant 0 : index
    %c8 = arith.constant 8 : index
    %1 = vector.load %arg1[%c0_2, %c0_3, %c8] : memref<1x9x72xf32, #tpu.memory_space<vmem>>, vector<1x8x64xf32>
    %c0_4 = arith.constant 0 : index
    %c1 = arith.constant 1 : index
    %c0_5 = arith.constant 0 : index
    %2 = vector.load %arg1[%c0_4, %c1, %c0_5] : memref<1x9x72xf32, #tpu.memory_space<vmem>>, vector<1x8x64xf32>
    %c0_6 = arith.constant 0 : index
    %c1_7 = arith.constant 1 : index
    %c8_8 = arith.constant 8 : index
    %3 = vector.load %arg1[%c0_6, %c1_7, %c8_8] : memref<1x9x72xf32, #tpu.memory_space<vmem>>, vector<1x8x64xf32>
    %4 = arith.maximumf %0, %1 : vector<1x8x64xf32>
    %5 = arith.maximumf %2, %3 : vector<1x8x64xf32>
    %6 = arith.maximumf %4, %5 : vector<1x8x64xf32>
    %c0_9 = arith.constant 0 : index
    %c0_10 = arith.constant 0 : index
    %c0_11 = arith.constant 0 : index
    %7 = vector.load %arg2[%c0_9, %c0_10, %c0_11] : memref<1x8x64xf32, #tpu.memory_space<vmem>>, vector<1x8x64xf32>
    tpu.vector_store %arg2[%c0_9, %c0_10, %c0_11], %6 {strides = array<i32>} : memref<1x8x64xf32, #tpu.memory_space<vmem>>, vector<1x8x64xf32>,
    return
  }
  func.func @transform_0(%arg0: i32) -> (i32, i32, i32) {
    %c0_i32 = arith.constant 0 : i32
    %c0_i32_0 = arith.constant 0 : i32
    %c0_i32_1 = arith.constant 0 : i32
    return %arg0, %c0_i32, %c0_i32_0 : i32, i32, i32
  }
  func.func @transform_1(%arg0: i32) -> (i32, i32, i32) {
    %c0_i32 = arith.constant 0 : i32
    %c0_i32_0 = arith.constant 0 : i32
    %c0_i32_1 = arith.constant 0 : i32
    return %arg0, %c0_i32, %c0_i32_0 : i32, i32, i32
  }
}

module attributes {stable_mosaic.version = 11 : i64} {
  func.func @_matmul_bn_act_x2_kernel(%arg0: i32, %arg1: memref<32x144xbf16, #tpu.memory_space<vmem>>, %arg2: memref<144x128xbf16, #tpu.memory_space<vmem>>, %arg3: memref<1x128xf32, #tpu.memory_space<vmem>>, %arg4: memref<1x128xf32, #tpu.memory_space<vmem>>, %arg5: memref<128x128xbf16, #tpu.memory_space<vmem>>, %arg6: memref<1x128xf32, #tpu.memory_space<vmem>>, %arg7: memref<1x128xf32, #tpu.memory_space<vmem>>, %arg8: memref<32x128xf32, #tpu.memory_space<vmem>>) attributes {dimension_semantics = [#tpu.dimension_semantics<parallel>], iteration_bounds = array<i64: 1>, scalar_prefetch = 0 : i64, scratch_operands = 0 : i64, tpu.core_type = #tpu.core_type<tc>, window_params = [{transform_indices = @transform_0, window_bounds = array<i64: 32, 144>}, {pipeline_mode = #tpu.pipeline_mode<synchronous>, transform_indices = @transform_1, window_bounds = array<i64: 144, 128>}, {pipeline_mode = #tpu.pipeline_mode<synchronous>, transform_indices = @transform_2, window_bounds = array<i64: 1, 128>}, {pipeline_mode = #tpu.pipeline_mode<synchronous>, transform_indices = @transform_3, window_bounds = array<i64: 1, 128>}, {pipeline_mode = #tpu.pipeline_mode<synchronous>, transform_indices = @transform_4, window_bounds = array<i64: 128, 128>}, {pipeline_mode = #tpu.pipeline_mode<synchronous>, transform_indices = @transform_5, window_bounds = array<i64: 1, 128>}, {pipeline_mode = #tpu.pipeline_mode<synchronous>, transform_indices = @transform_6, window_bounds = array<i64: 1, 128>}, {transform_indices = @transform_7, window_bounds = array<i64: 32, 128>}]} {
    %c0 = arith.constant 0 : index
    %c0_0 = arith.constant 0 : index
    %0 = vector.load %arg1[%c0, %c0_0] : memref<32x144xbf16, #tpu.memory_space<vmem>>, vector<32x144xbf16>
    %c0_1 = arith.constant 0 : index
    %c0_2 = arith.constant 0 : index
    %1 = vector.load %arg2[%c0_1, %c0_2] : memref<144x128xbf16, #tpu.memory_space<vmem>>, vector<144x128xbf16>
    %cst = arith.constant dense<0.000000e+00> : vector<32x128xf32>
    %2 = tpu.matmul %0, %1, %cst {dimension_numbers = #tpu.dot_dimension_numbers<[1], [0], [0], [1], [0, 0, 1, 1], [], []>} : vector<32x144xbf16>, vector<144x128xbf16>, vector<32x128xf32> -> vector<32x128xf32>
    %c0_3 = arith.constant 0 : index
    %c0_4 = arith.constant 0 : index
    %3 = vector.load %arg3[%c0_3, %c0_4] : memref<1x128xf32, #tpu.memory_space<vmem>>, vector<1x128xf32>
    %4 = vector.broadcast %3 : vector<1x128xf32> to vector<32x128xf32>
    %5 = arith.mulf %2, %4 : vector<32x128xf32>
    %c0_5 = arith.constant 0 : index
    %c0_6 = arith.constant 0 : index
    %6 = vector.load %arg4[%c0_5, %c0_6] : memref<1x128xf32, #tpu.memory_space<vmem>>, vector<1x128xf32>
    %7 = vector.broadcast %6 : vector<1x128xf32> to vector<32x128xf32>
    %8 = arith.addf %5, %7 : vector<32x128xf32>
    %cst_7 = arith.constant 0.000000e+00 : f32
    %9 = vector.broadcast %cst_7 : f32 to vector<32x128xf32>
    %10 = arith.maximumf %8, %9 : vector<32x128xf32>
    %11 = arith.truncf %10 : vector<32x128xf32> to vector<32x128xbf16>
    %c0_8 = arith.constant 0 : index
    %c0_9 = arith.constant 0 : index
    %12 = vector.load %arg5[%c0_8, %c0_9] : memref<128x128xbf16, #tpu.memory_space<vmem>>, vector<128x128xbf16>
    %cst_10 = arith.constant dense<0.000000e+00> : vector<32x128xf32>
    %13 = tpu.matmul %11, %12, %cst_10 {dimension_numbers = #tpu.dot_dimension_numbers<[1], [0], [0], [1], [0, 0, 1, 1], [], []>} : vector<32x128xbf16>, vector<128x128xbf16>, vector<32x128xf32> -> vector<32x128xf32>
    %c0_11 = arith.constant 0 : index
    %c0_12 = arith.constant 0 : index
    %14 = vector.load %arg6[%c0_11, %c0_12] : memref<1x128xf32, #tpu.memory_space<vmem>>, vector<1x128xf32>
    %15 = vector.broadcast %14 : vector<1x128xf32> to vector<32x128xf32>
    %16 = arith.mulf %13, %15 : vector<32x128xf32>
    %c0_13 = arith.constant 0 : index
    %c0_14 = arith.constant 0 : index
    %17 = vector.load %arg7[%c0_13, %c0_14] : memref<1x128xf32, #tpu.memory_space<vmem>>, vector<1x128xf32>
    %18 = vector.broadcast %17 : vector<1x128xf32> to vector<32x128xf32>
    %19 = arith.addf %16, %18 : vector<32x128xf32>
    %cst_15 = arith.constant 0.000000e+00 : f32
    %20 = vector.broadcast %cst_15 : f32 to vector<32x128xf32>
    %21 = arith.maximumf %19, %20 : vector<32x128xf32>
    %c0_16 = arith.constant 0 : index
    %c0_17 = arith.constant 0 : index
    %22 = vector.load %arg8[%c0_16, %c0_17] : memref<32x128xf32, #tpu.memory_space<vmem>>, vector<32x128xf32>
    tpu.vector_store %arg8[%c0_16, %c0_17], %21 {strides = array<i32>} : memref<32x128xf32, #tpu.memory_space<vmem>>, vector<32x128xf32>,
    return
  }
  func.func @transform_0(%arg0: i32) -> (i32, i32) {
    %c0_i32 = arith.constant 0 : i32
    %c0_i32_0 = arith.constant 0 : i32
    return %arg0, %c0_i32 : i32, i32
  }
  func.func @transform_1(%arg0: i32) -> (i32, i32) {
    %c0_i32 = arith.constant 0 : i32
    %c0_i32_0 = arith.constant 0 : i32
    %c0_i32_1 = arith.constant 0 : i32
    return %c0_i32, %c0_i32_0 : i32, i32
  }
  func.func @transform_2(%arg0: i32) -> (i32, i32) {
    %c0_i32 = arith.constant 0 : i32
    %c0_i32_0 = arith.constant 0 : i32
    %c0_i32_1 = arith.constant 0 : i32
    return %c0_i32, %c0_i32_0 : i32, i32
  }
  func.func @transform_3(%arg0: i32) -> (i32, i32) {
    %c0_i32 = arith.constant 0 : i32
    %c0_i32_0 = arith.constant 0 : i32
    %c0_i32_1 = arith.constant 0 : i32
    return %c0_i32, %c0_i32_0 : i32, i32
  }
  func.func @transform_4(%arg0: i32) -> (i32, i32) {
    %c0_i32 = arith.constant 0 : i32
    %c0_i32_0 = arith.constant 0 : i32
    %c0_i32_1 = arith.constant 0 : i32
    return %c0_i32, %c0_i32_0 : i32, i32
  }
  func.func @transform_5(%arg0: i32) -> (i32, i32) {
    %c0_i32 = arith.constant 0 : i32
    %c0_i32_0 = arith.constant 0 : i32
    %c0_i32_1 = arith.constant 0 : i32
    return %c0_i32, %c0_i32_0 : i32, i32
  }
  func.func @transform_6(%arg0: i32) -> (i32, i32) {
    %c0_i32 = arith.constant 0 : i32
    %c0_i32_0 = arith.constant 0 : i32
    %c0_i32_1 = arith.constant 0 : i32
    return %c0_i32, %c0_i32_0 : i32, i32
  }
  func.func @transform_7(%arg0: i32) -> (i32, i32) {
    %c0_i32 = arith.constant 0 : i32
    %c0_i32_0 = arith.constant 0 : i32
    return %arg0, %c0_i32 : i32, i32
  }
}

</mosaic_0001>

<llo_original>
// kernel: _lambda_.5
$region0: #{_lambda_.5}
  #allocation0 [shape = 'u32[]', space=smem, size = 0x4, offset = 0x4, fixed_abs, tag = 'smem constant byte address 0x4 - core index']
  #allocation1 [shape = 'u32[72,128]{1,0:T(1,128)}', space=vmem, size = 0x9000, scoped, tag = 'internal scratch']
  %s0 = inlined_call_operand.vmem [shape: bf16[128,36], index: 0, kind: input, shape index: {}]
  %s1 = inlined_call_operand.vmem [shape: bf16[36,128], index: 1, kind: input, shape index: {}]
  %s2 = inlined_call_operand.vmem [shape: f32[1,128], index: 2, kind: input, shape index: {}]
  %s3 = inlined_call_operand.vmem [shape: f32[1,128], index: 3, kind: input, shape index: {}]
  %s4 = inlined_call_operand.vmem [shape: f32[128,128], index: 4, kind: output, shape index: {}]
  %s5 = sld [smem:[#allocation0]]
  $region26: #{_lambda_.5} parent=0
    _
  %s7 = ssub.s32 1, %s5
  %s8 = scalar_select 0, %s7, %s5
  // Predicated region
  $region2: #{_lambda_.5} parent=0 // pred_check
    _
  $region3: #{_lambda_.5} parent=0 // pred_check_branch
    %10 = sbr.rel (0) target = $region5
  $region4: #{_lambda_.5} parent=0 // pred_region
    _
  $region5: #{_lambda_.5} parent=0 // pred_fallthru
    _
  // Predicated region
  $region6: #{_lambda_.5} parent=0 // pred_check
    _
  $region7: #{_lambda_.5} parent=0 // pred_check_branch
    %12 = sbr.rel (0) target = $region9
  $region8: #{_lambda_.5} parent=0 // pred_region
    _
  $region9: #{_lambda_.5} parent=0 // pred_fallthru
    _
  // Predicated region
  $region10: #{_lambda_.5} parent=0 // pred_check
    _
  $region11: #{_lambda_.5} parent=0 // pred_check_branch
    %14 = sbr.rel (0) target = $region13
  $region12: #{_lambda_.5} parent=0 // pred_region
    _
  $region13: #{_lambda_.5} parent=0 // pred_fallthru
    _
  // Predicated region
  $region14: #{_lambda_.5} parent=0 // pred_check
    _
  $region15: #{_lambda_.5} parent=0 // pred_check_branch
    %16 = sbr.rel (0) target = $region17
  $region16: #{_lambda_.5} parent=0 // pred_region
    _
  $region17: #{_lambda_.5} parent=0 // pred_fallthru
    _
  %v18 = vld [vmem:[%s0] sm:$0xf]
  %v19 = vld [vmem:[%s0 + $0x4] sm:$0xf]
  %v20 = vld [vmem:[%s0 + $0x8] sm:$0xf]
  %v21 = vld [vmem:[%s0 + $0xc] sm:$0xf]
  %v22 = vld [vmem:[%s0 + $0x10] sm:$0xf]
  %v23 = vld [vmem:[%s0 + $0x14] sm:$0xf]
  %v24 = vld [vmem:[%s0 + $0x18] sm:$0xf]
  %v25 = vld [vmem:[%s0 + $0x1c] sm:$0xf]
  %v26 = vld [vmem:[%s0 + $0x20] sm:$0xf]
  %v27 = vld [vmem:[%s0 + $0x24] sm:$0xf]
  %v28 = vld [vmem:[%s0 + $0x28] sm:$0xf]
  %v29 = vld [vmem:[%s0 + $0x2c] sm:$0xf]
  %v30 = vld [vmem:[%s0 + $0x30] sm:$0xf]
  %v31 = vld [vmem:[%s0 + $0x34] sm:$0xf]
  %v32 = vld [vmem:[%s0 + $0x38] sm:$0xf]
  %v33 = vld [vmem:[%s0 + $0x3c] sm:$0xf]
  %v34 = vld [vmem:[%s1] sm:$0xf]
  %v35 = vld [vmem:[%s1 + $0x4] sm:$0xf]
  %v36 = vld [vmem:[%s1 + $0x8] sm:$0xf]
  %v37 = vld [vmem:[%s1 + $0xc] sm:$0xf]
  %v38 = vld [vmem:[%s1 + $0x10] sm:$0x3]
  %v55 = vunpack.c.l.b16 %v18
  %v56 = vunpack.c.l.b16 %v19
  %v57 = vunpack.c.l.b16 %v20
  %v58 = vunpack.c.l.b16 %v21
  %v59 = vunpack.c.l.b16 %v22
  %v60 = vunpack.c.l.b16 %v23
  %v61 = vunpack.c.l.b16 %v24
  %v62 = vunpack.c.l.b16 %v25
  %v63 = vunpack.c.l.b16 %v26
  %v64 = vunpack.c.l.b16 %v27
  %v65 = vunpack.c.l.b16 %v28
  %v66 = vunpack.c.l.b16 %v29
  %v67 = vunpack.c.l.b16 %v30
  %v68 = vunpack.c.l.b16 %v31
  %v69 = vunpack.c.l.b16 %v32
  %v70 = vunpack.c.l.b16 %v33
  %v71 = vpack.c.b16 %v56, %v55
  %v72 = vpack.c.b16 %v58, %v57
  %v73 = vpack.c.b16 %v60, %v59
  %v74 = vpack.c.b16 %v62, %v61
  %v75 = vpack.c.b16 %v64, %v63
  %v76 = vpack.c.b16 %v66, %v65
  %v77 = vpack.c.b16 %v68, %v67
  %v78 = vpack.c.b16 %v70, %v69
  %v84 = vunpack.c.l.b16 %v34
  %v85 = vunpack.c.l.b16 %v35
  %v86 = vunpack.c.l.b16 %v36
  %v87 = vunpack.c.l.b16 %v37
  %v88 = vunpack.c.l.b16 %v38
  %v89 = vpack.c.b16 %v85, %v84
  %v90 = vpack.c.b16 %v87, %v86
  %v91 = vpack.c.b16 %v88, %v88
  %vm94 = vcmask 293888
  %v96 = vsel %vm94, %v71, 0
  %v99 = vsel %vm94, %v72, 0
  %v102 = vsel %vm94, %v73, 0
  %v105 = vsel %vm94, %v74, 0
  %v108 = vsel %vm94, %v75, 0
  %v111 = vsel %vm94, %v76, 0
  %v114 = vsel %vm94, %v77, 0
  %v117 = vsel %vm94, %v78, 0
  %vm119 = vcmask 1041408
  %v121 = vsel %vm119, %v91, 0
  %123 = vmatpush.bf16.msra.mxu0 0
  %124 = vmatpush.bf16.msra.mxu0 0
  %125 = vmatpush.bf16.msra.mxu0 0
  %126 = vmatpush.bf16.msra.mxu0 0
  %127 = vmatpush.bf16.msra.mxu0 0
  %128 = vmatpush.bf16.msra.mxu0 %v121
  %129 = vmatpush.bf16.msra.mxu0 %v90
  %130 = vmatpush.bf16.msra.mxu0 %v89
  %131 = vmatmul.bf16.gmra.mxu0 %v96
  %v132 = vpop.f32.mrf.mxu0
  %v133 = vadd.f32 0.0, %v132
  %v134 = vpop.f32.mrf.mxu0
  %v135 = vadd.f32 0.0, %v134
  %136 = vmatmul.bf16.gmra.mxu0 %v99
  %v137 = vpop.f32.mrf.mxu0
  %v138 = vadd.f32 0.0, %v137
  %v139 = vpop.f32.mrf.mxu0
  %v140 = vadd.f32 0.0, %v139
  %141 = vmatmul.bf16.gmra.mxu0 %v102
  %v142 = vpop.f32.mrf.mxu0
  %v143 = vadd.f32 0.0, %v142
  %v144 = vpop.f32.mrf.mxu0
  %v145 = vadd.f32 0.0, %v144
  %146 = vmatmul.bf16.gmra.mxu0 %v105
  %v147 = vpop.f32.mrf.mxu0
  %v148 = vadd.f32 0.0, %v147
  %v149 = vpop.f32.mrf.mxu0
  %v150 = vadd.f32 0.0, %v149
  %151 = vmatmul.bf16.gmra.mxu0 %v108
  %v152 = vpop.f32.mrf.mxu0
  %v153 = vadd.f32 0.0, %v152
  %v154 = vpop.f32.mrf.mxu0
  %v155 = vadd.f32 0.0, %v154
  %156 = vmatmul.bf16.gmra.mxu0 %v111
  %v157 = vpop.f32.mrf.mxu0
  %v158 = vadd.f32 0.0, %v157
  %v159 = vpop.f32.mrf.mxu0
  %v160 = vadd.f32 0.0, %v159
  %161 = vmatmul.bf16.gmra.mxu0 %v114
  %v162 = vpop.f32.mrf.mxu0
  %v163 = vadd.f32 0.0, %v162
  %v164 = vpop.f32.mrf.mxu0
  %v165 = vadd.f32 0.0, %v164
  %166 = vmatmul.bf16.gmra.mxu0 %v117
  %v167 = vpop.f32.mrf.mxu0
  %v168 = vadd.f32 0.0, %v167
  %v169 = vpop.f32.mrf.mxu0
  %v170 = vadd.f32 0.0, %v169
  %171 = vdwg.mxu0
  %v172 = vld [vmem:[%s2] sm:$0x1]
  %v174 = vperm.slane %v172, 0
  %v176 = vmul.f32 %v133, %v174
  %v177 = vmul.f32 %v135, %v174
  %v178 = vmul.f32 %v138, %v174
  %v179 = vmul.f32 %v140, %v174
  %v180 = vmul.f32 %v143, %v174
  %v181 = vmul.f32 %v145, %v174
  %v182 = vmul.f32 %v148, %v174
  %v183 = vmul.f32 %v150, %v174
  %v184 = vmul.f32 %v153, %v174
  %v185 = vmul.f32 %v155, %v174
  %v186 = vmul.f32 %v158, %v174
  %v187 = vmul.f32 %v160, %v174
  %v188 = vmul.f32 %v163, %v174
  %v189 = vmul.f32 %v165, %v174
  %v190 = vmul.f32 %v168, %v174
  %v191 = vmul.f32 %v170, %v174
  %v192 = vld [vmem:[%s3] sm:$0x1]
  %v194 = vperm.slane %v192, 0
  %v196 = vadd.f32 %v176, %v194
  %v197 = vadd.f32 %v177, %v194
  %v198 = vadd.f32 %v178, %v194
  %v199 = vadd.f32 %v179, %v194
  %v200 = vadd.f32 %v180, %v194
  %v201 = vadd.f32 %v181, %v194
  %v202 = vadd.f32 %v182, %v194
  %v203 = vadd.f32 %v183, %v194
  %v204 = vadd.f32 %v184, %v194
  %v205 = vadd.f32 %v185, %v194
  %v206 = vadd.f32 %v186, %v194
  %v207 = vadd.f32 %v187, %v194
  %v208 = vadd.f32 %v188, %v194
  %v209 = vadd.f32 %v189, %v194
  %v210 = vadd.f32 %v190, %v194
  %v211 = vadd.f32 %v191, %v194
  %v212 = vmax.f32 %v196, 0.0
  %v213 = vmax.f32 %v197, 0.0
  %v214 = vmax.f32 %v198, 0.0
  %v215 = vmax.f32 %v199, 0.0
  %v216 = vmax.f32 %v200, 0.0
  %v217 = vmax.f32 %v201, 0.0
  %v218 = vmax.f32 %v202, 0.0
  %v219 = vmax.f32 %v203, 0.0
  %v220 = vmax.f32 %v204, 0.0
  %v221 = vmax.f32 %v205, 0.0
  %v222 = vmax.f32 %v206, 0.0
  %v223 = vmax.f32 %v207, 0.0
  %v224 = vmax.f32 %v208, 0.0
  %v225 = vmax.f32 %v209, 0.0
  %v226 = vmax.f32 %v210, 0.0
  %v227 = vmax.f32 %v211, 0.0
  %228 = vst [vmem:[%s4] sm:$0xff] %v212
  %229 = vst [vmem:[%s4 + $0x8] sm:$0xff] %v213
  %230 = vst [vmem:[%s4 + $0x10] sm:$0xff] %v214
  %231 = vst [vmem:[%s4 + $0x18] sm:$0xff] %v215
  %232 = vst [vmem:[%s4 + $0x20] sm:$0xff] %v216
  %233 = vst [vmem:[%s4 + $0x28] sm:$0xff] %v217
  %234 = vst [vmem:[%s4 + $0x30] sm:$0xff] %v218
  %235 = vst [vmem:[%s4 + $0x38] sm:$0xff] %v219
  %236 = vst [vmem:[%s4 + $0x40] sm:$0xff] %v220
  %237 = vst [vmem:[%s4 + $0x48] sm:$0xff] %v221
  %238 = vst [vmem:[%s4 + $0x50] sm:$0xff] %v222
  %239 = vst [vmem:[%s4 + $0x58] sm:$0xff] %v223
  %240 = vst [vmem:[%s4 + $0x60] sm:$0xff] %v224
  %241 = vst [vmem:[%s4 + $0x68] sm:$0xff] %v225
  %242 = vst [vmem:[%s4 + $0x70] sm:$0xff] %v226
  %243 = vst [vmem:[%s4 + $0x78] sm:$0xff] %v227
  // Predicated region
  $region18: #{_lambda_.5} parent=0 // pred_check
    _
  $region19: #{_lambda_.5} parent=0 // pred_check_branch
    %245 = sbr.rel (0) target = $region21
  $region20: #{_lambda_.5} parent=0 // pred_region
    _
  $region21: #{_lambda_.5} parent=0 // pred_fallthru
    _
  // Predicated region
  $region22: #{_lambda_.5} parent=0 // pred_check
    _
  $region23: #{_lambda_.5} parent=0 // pred_check_branch
    %247 = sbr.rel (0) target = $region25
  $region24: #{_lambda_.5} parent=0 // pred_region
    _
  $region25: #{_lambda_.5} parent=0 // pred_fallthru
    _

// kernel: _lambda_.6
$region0: #{_lambda_.6}
  #allocation0 [shape = 'u32[]', space=smem, size = 0x4, offset = 0x4, fixed_abs, tag = 'smem constant byte address 0x4 - core index']
  #allocation1 [shape = 'u32[72,128]{1,0:T(1,128)}', space=vmem, size = 0x9000, scoped, tag = 'internal scratch']
  %s0 = inlined_call_operand.vmem [shape: bf16[128,32], index: 0, kind: input, shape index: {}]
  %s1 = inlined_call_operand.vmem [shape: bf16[32,128], index: 1, kind: input, shape index: {}]
  %s2 = inlined_call_operand.vmem [shape: f32[1,128], index: 2, kind: input, shape index: {}]
  %s3 = inlined_call_operand.vmem [shape: f32[1,128], index: 3, kind: input, shape index: {}]
  %s4 = inlined_call_operand.vmem [shape: f32[128,128], index: 4, kind: output, shape index: {}]
  %s5 = sld [smem:[#allocation0]]
  $region26: #{_lambda_.6} parent=0
    _
  %s7 = ssub.s32 1, %s5
  %s8 = scalar_select 0, %s7, %s5
  // Predicated region
  $region2: #{_lambda_.6} parent=0 // pred_check
    _
  $region3: #{_lambda_.6} parent=0 // pred_check_branch
    %10 = sbr.rel (0) target = $region5
  $region4: #{_lambda_.6} parent=0 // pred_region
    _
  $region5: #{_lambda_.6} parent=0 // pred_fallthru
    _
  // Predicated region
  $region6: #{_lambda_.6} parent=0 // pred_check
    _
  $region7: #{_lambda_.6} parent=0 // pred_check_branch
    %12 = sbr.rel (0) target = $region9
  $region8: #{_lambda_.6} parent=0 // pred_region
    _
  $region9: #{_lambda_.6} parent=0 // pred_fallthru
    _
  // Predicated region
  $region10: #{_lambda_.6} parent=0 // pred_check
    _
  $region11: #{_lambda_.6} parent=0 // pred_check_branch
    %14 = sbr.rel (0) target = $region13
  $region12: #{_lambda_.6} parent=0 // pred_region
    _
  $region13: #{_lambda_.6} parent=0 // pred_fallthru
    _
  // Predicated region
  $region14: #{_lambda_.6} parent=0 // pred_check
    _
  $region15: #{_lambda_.6} parent=0 // pred_check_branch
    %16 = sbr.rel (0) target = $region17
  $region16: #{_lambda_.6} parent=0 // pred_region
    _
  $region17: #{_lambda_.6} parent=0 // pred_fallthru
    _
  %v18 = vld [vmem:[%s0] sm:$0xf]
  %v19 = vld [vmem:[%s0 + $0x4] sm:$0xf]
  %v20 = vld [vmem:[%s0 + $0x8] sm:$0xf]
  %v21 = vld [vmem:[%s0 + $0xc] sm:$0xf]
  %v22 = vld [vmem:[%s0 + $0x10] sm:$0xf]
  %v23 = vld [vmem:[%s0 + $0x14] sm:$0xf]
  %v24 = vld [vmem:[%s0 + $0x18] sm:$0xf]
  %v25 = vld [vmem:[%s0 + $0x1c] sm:$0xf]
  %v26 = vld [vmem:[%s0 + $0x20] sm:$0xf]
  %v27 = vld [vmem:[%s0 + $0x24] sm:$0xf]
  %v28 = vld [vmem:[%s0 + $0x28] sm:$0xf]
  %v29 = vld [vmem:[%s0 + $0x2c] sm:$0xf]
  %v30 = vld [vmem:[%s0 + $0x30] sm:$0xf]
  %v31 = vld [vmem:[%s0 + $0x34] sm:$0xf]
  %v32 = vld [vmem:[%s0 + $0x38] sm:$0xf]
  %v33 = vld [vmem:[%s0 + $0x3c] sm:$0xf]
  %v34 = vld [vmem:[%s1] sm:$0xf]
  %v35 = vld [vmem:[%s1 + $0x4] sm:$0xf]
  %v36 = vld [vmem:[%s1 + $0x8] sm:$0xf]
  %v37 = vld [vmem:[%s1 + $0xc] sm:$0xf]
  %v54 = vunpack.c.l.b16 %v18
  %v55 = vunpack.c.l.b16 %v19
  %v56 = vunpack.c.l.b16 %v20
  %v57 = vunpack.c.l.b16 %v21
  %v58 = vunpack.c.l.b16 %v22
  %v59 = vunpack.c.l.b16 %v23
  %v60 = vunpack.c.l.b16 %v24
  %v61 = vunpack.c.l.b16 %v25
  %v62 = vunpack.c.l.b16 %v26
  %v63 = vunpack.c.l.b16 %v27
  %v64 = vunpack.c.l.b16 %v28
  %v65 = vunpack.c.l.b16 %v29
  %v66 = vunpack.c.l.b16 %v30
  %v67 = vunpack.c.l.b16 %v31
  %v68 = vunpack.c.l.b16 %v32
  %v69 = vunpack.c.l.b16 %v33
  %v70 = vpack.c.b16 %v55, %v54
  %v71 = vpack.c.b16 %v57, %v56
  %v72 = vpack.c.b16 %v59, %v58
  %v73 = vpack.c.b16 %v61, %v60
  %v74 = vpack.c.b16 %v63, %v62
  %v75 = vpack.c.b16 %v65, %v64
  %v76 = vpack.c.b16 %v67, %v66
  %v77 = vpack.c.b16 %v69, %v68
  %v82 = vunpack.c.l.b16 %v34
  %v83 = vunpack.c.l.b16 %v35
  %v84 = vunpack.c.l.b16 %v36
  %v85 = vunpack.c.l.b16 %v37
  %v86 = vpack.c.b16 %v83, %v82
  %v87 = vpack.c.b16 %v85, %v84
  %vm90 = vcmask 261120
  %v92 = vsel %vm90, %v70, 0
  %v95 = vsel %vm90, %v71, 0
  %v98 = vsel %vm90, %v72, 0
  %v101 = vsel %vm90, %v73, 0
  %v104 = vsel %vm90, %v74, 0
  %v107 = vsel %vm90, %v75, 0
  %v110 = vsel %vm90, %v76, 0
  %v113 = vsel %vm90, %v77, 0
  %115 = vmatpush.bf16.msra.mxu0 0
  %116 = vmatpush.bf16.msra.mxu0 0
  %117 = vmatpush.bf16.msra.mxu0 0
  %118 = vmatpush.bf16.msra.mxu0 0
  %119 = vmatpush.bf16.msra.mxu0 0
  %120 = vmatpush.bf16.msra.mxu0 0
  %121 = vmatpush.bf16.msra.mxu0 %v87
  %122 = vmatpush.bf16.msra.mxu0 %v86
  %123 = vmatmul.bf16.gmra.mxu0 %v92
  %v124 = vpop.f32.mrf.mxu0
  %v125 = vadd.f32 0.0, %v124
  %v126 = vpop.f32.mrf.mxu0
  %v127 = vadd.f32 0.0, %v126
  %128 = vmatmul.bf16.gmra.mxu0 %v95
  %v129 = vpop.f32.mrf.mxu0
  %v130 = vadd.f32 0.0, %v129
  %v131 = vpop.f32.mrf.mxu0
  %v132 = vadd.f32 0.0, %v131
  %133 = vmatmul.bf16.gmra.mxu0 %v98
  %v134 = vpop.f32.mrf.mxu0
  %v135 = vadd.f32 0.0, %v134
  %v136 = vpop.f32.mrf.mxu0
  %v137 = vadd.f32 0.0, %v136
  %138 = vmatmul.bf16.gmra.mxu0 %v101
  %v139 = vpop.f32.mrf.mxu0
  %v140 = vadd.f32 0.0, %v139
  %v141 = vpop.f32.mrf.mxu0
  %v142 = vadd.f32 0.0, %v141
  %143 = vmatmul.bf16.gmra.mxu0 %v104
  %v144 = vpop.f32.mrf.mxu0
  %v145 = vadd.f32 0.0, %v144
  %v146 = vpop.f32.mrf.mxu0
  %v147 = vadd.f32 0.0, %v146
  %148 = vmatmul.bf16.gmra.mxu0 %v107
  %v149 = vpop.f32.mrf.mxu0
  %v150 = vadd.f32 0.0, %v149
  %v151 = vpop.f32.mrf.mxu0
  %v152 = vadd.f32 0.0, %v151
  %153 = vmatmul.bf16.gmra.mxu0 %v110
  %v154 = vpop.f32.mrf.mxu0
  %v155 = vadd.f32 0.0, %v154
  %v156 = vpop.f32.mrf.mxu0
  %v157 = vadd.f32 0.0, %v156
  %158 = vmatmul.bf16.gmra.mxu0 %v113
  %v159 = vpop.f32.mrf.mxu0
  %v160 = vadd.f32 0.0, %v159
  %v161 = vpop.f32.mrf.mxu0
  %v162 = vadd.f32 0.0, %v161
  %163 = vdwg.mxu0
  %v164 = vld [vmem:[%s2] sm:$0x1]
  %v166 = vperm.slane %v164, 0
  %v168 = vmul.f32 %v125, %v166
  %v169 = vmul.f32 %v127, %v166
  %v170 = vmul.f32 %v130, %v166
  %v171 = vmul.f32 %v132, %v166
  %v172 = vmul.f32 %v135, %v166
  %v173 = vmul.f32 %v137, %v166
  %v174 = vmul.f32 %v140, %v166
  %v175 = vmul.f32 %v142, %v166
  %v176 = vmul.f32 %v145, %v166
  %v177 = vmul.f32 %v147, %v166
  %v178 = vmul.f32 %v150, %v166
  %v179 = vmul.f32 %v152, %v166
  %v180 = vmul.f32 %v155, %v166
  %v181 = vmul.f32 %v157, %v166
  %v182 = vmul.f32 %v160, %v166
  %v183 = vmul.f32 %v162, %v166
  %v184 = vld [vmem:[%s3] sm:$0x1]
  %v186 = vperm.slane %v184, 0
  %v188 = vadd.f32 %v168, %v186
  %v189 = vadd.f32 %v169, %v186
  %v190 = vadd.f32 %v170, %v186
  %v191 = vadd.f32 %v171, %v186
  %v192 = vadd.f32 %v172, %v186
  %v193 = vadd.f32 %v173, %v186
  %v194 = vadd.f32 %v174, %v186
  %v195 = vadd.f32 %v175, %v186
  %v196 = vadd.f32 %v176, %v186
  %v197 = vadd.f32 %v177, %v186
  %v198 = vadd.f32 %v178, %v186
  %v199 = vadd.f32 %v179, %v186
  %v200 = vadd.f32 %v180, %v186
  %v201 = vadd.f32 %v181, %v186
  %v202 = vadd.f32 %v182, %v186
  %v203 = vadd.f32 %v183, %v186
  %v204 = vmax.f32 %v188, 0.0
  %v205 = vmax.f32 %v189, 0.0
  %v206 = vmax.f32 %v190, 0.0
  %v207 = vmax.f32 %v191, 0.0
  %v208 = vmax.f32 %v192, 0.0
  %v209 = vmax.f32 %v193, 0.0
  %v210 = vmax.f32 %v194, 0.0
  %v211 = vmax.f32 %v195, 0.0
  %v212 = vmax.f32 %v196, 0.0
  %v213 = vmax.f32 %v197, 0.0
  %v214 = vmax.f32 %v198, 0.0
  %v215 = vmax.f32 %v199, 0.0
  %v216 = vmax.f32 %v200, 0.0
  %v217 = vmax.f32 %v201, 0.0
  %v218 = vmax.f32 %v202, 0.0
  %v219 = vmax.f32 %v203, 0.0
  %220 = vst [vmem:[%s4] sm:$0xff] %v204
  %221 = vst [vmem:[%s4 + $0x8] sm:$0xff] %v205
  %222 = vst [vmem:[%s4 + $0x10] sm:$0xff] %v206
  %223 = vst [vmem:[%s4 + $0x18] sm:$0xff] %v207
  %224 = vst [vmem:[%s4 + $0x20] sm:$0xff] %v208
  %225 = vst [vmem:[%s4 + $0x28] sm:$0xff] %v209
  %226 = vst [vmem:[%s4 + $0x30] sm:$0xff] %v210
  %227 = vst [vmem:[%s4 + $0x38] sm:$0xff] %v211
  %228 = vst [vmem:[%s4 + $0x40] sm:$0xff] %v212
  %229 = vst [vmem:[%s4 + $0x48] sm:$0xff] %v213
  %230 = vst [vmem:[%s4 + $0x50] sm:$0xff] %v214
  %231 = vst [vmem:[%s4 + $0x58] sm:$0xff] %v215
  %232 = vst [vmem:[%s4 + $0x60] sm:$0xff] %v216
  %233 = vst [vmem:[%s4 + $0x68] sm:$0xff] %v217
  %234 = vst [vmem:[%s4 + $0x70] sm:$0xff] %v218
  %235 = vst [vmem:[%s4 + $0x78] sm:$0xff] %v219
  // Predicated region
  $region18: #{_lambda_.6} parent=0 // pred_check
    _
  $region19: #{_lambda_.6} parent=0 // pred_check_branch
    %237 = sbr.rel (0) target = $region21
  $region20: #{_lambda_.6} parent=0 // pred_region
    _
  $region21: #{_lambda_.6} parent=0 // pred_fallthru
    _
  // Predicated region
  $region22: #{_lambda_.6} parent=0 // pred_check
    _
  $region23: #{_lambda_.6} parent=0 // pred_check_branch
    %239 = sbr.rel (0) target = $region25
  $region24: #{_lambda_.6} parent=0 // pred_region
    _
  $region25: #{_lambda_.6} parent=0 // pred_fallthru
    _

// kernel: _lambda_.7
$region0: #{_lambda_.7}
  #allocation0 [shape = 'u32[]', space=smem, size = 0x4, offset = 0x4, fixed_abs, tag = 'smem constant byte address 0x4 - core index']
  #allocation1 [shape = 'u32[72,128]{1,0:T(1,128)}', space=vmem, size = 0x9000, scoped, tag = 'internal scratch']
  %s0 = inlined_call_operand.vmem [shape: bf16[128,16], index: 0, kind: input, shape index: {}]
  %s1 = inlined_call_operand.vmem [shape: bf16[16,128], index: 1, kind: input, shape index: {}]
  %s2 = inlined_call_operand.vmem [shape: f32[1,128], index: 2, kind: input, shape index: {}]
  %s3 = inlined_call_operand.vmem [shape: f32[1,128], index: 3, kind: input, shape index: {}]
  %s4 = inlined_call_operand.vmem [shape: f32[128,128], index: 4, kind: output, shape index: {}]
  %s5 = sld [smem:[#allocation0]]
  $region26: #{_lambda_.7} parent=0
    _
  %s7 = ssub.s32 1, %s5
  %s8 = scalar_select 0, %s7, %s5
  // Predicated region
  $region2: #{_lambda_.7} parent=0 // pred_check
    _
  $region3: #{_lambda_.7} parent=0 // pred_check_branch
    %10 = sbr.rel (0) target = $region5
  $region4: #{_lambda_.7} parent=0 // pred_region
    _
  $region5: #{_lambda_.7} parent=0 // pred_fallthru
    _
  // Predicated region
  $region6: #{_lambda_.7} parent=0 // pred_check
    _
  $region7: #{_lambda_.7} parent=0 // pred_check_branch
    %12 = sbr.rel (0) target = $region9
  $region8: #{_lambda_.7} parent=0 // pred_region
    _
  $region9: #{_lambda_.7} parent=0 // pred_fallthru
    _
  // Predicated region
  $region10: #{_lambda_.7} parent=0 // pred_check
    _
  $region11: #{_lambda_.7} parent=0 // pred_check_branch
    %14 = sbr.rel (0) target = $region13
  $region12: #{_lambda_.7} parent=0 // pred_region
    _
  $region13: #{_lambda_.7} parent=0 // pred_fallthru
    _
  // Predicated region
  $region14: #{_lambda_.7} parent=0 // pred_check
    _
  $region15: #{_lambda_.7} parent=0 // pred_check_branch
    %16 = sbr.rel (0) target = $region17
  $region16: #{_lambda_.7} parent=0 // pred_region
    _
  $region17: #{_lambda_.7} parent=0 // pred_fallthru
    _
  %v18 = vld [vmem:[%s0] sm:$0xf]
  %v19 = vld [vmem:[%s0 + $0x4] sm:$0xf]
  %v20 = vld [vmem:[%s0 + $0x8] sm:$0xf]
  %v21 = vld [vmem:[%s0 + $0xc] sm:$0xf]
  %v22 = vld [vmem:[%s0 + $0x10] sm:$0xf]
  %v23 = vld [vmem:[%s0 + $0x14] sm:$0xf]
  %v24 = vld [vmem:[%s0 + $0x18] sm:$0xf]
  %v25 = vld [vmem:[%s0 + $0x1c] sm:$0xf]
  %v26 = vld [vmem:[%s0 + $0x20] sm:$0xf]
  %v27 = vld [vmem:[%s0 + $0x24] sm:$0xf]
  %v28 = vld [vmem:[%s0 + $0x28] sm:$0xf]
  %v29 = vld [vmem:[%s0 + $0x2c] sm:$0xf]
  %v30 = vld [vmem:[%s0 + $0x30] sm:$0xf]
  %v31 = vld [vmem:[%s0 + $0x34] sm:$0xf]
  %v32 = vld [vmem:[%s0 + $0x38] sm:$0xf]
  %v33 = vld [vmem:[%s0 + $0x3c] sm:$0xf]
  %v34 = vld [vmem:[%s1] sm:$0xf]
  %v35 = vld [vmem:[%s1 + $0x4] sm:$0xf]
  %v52 = vunpack.c.l.b16 %v18
  %v53 = vunpack.c.l.b16 %v19
  %v54 = vunpack.c.l.b16 %v20
  %v55 = vunpack.c.l.b16 %v21
  %v56 = vunpack.c.l.b16 %v22
  %v57 = vunpack.c.l.b16 %v23
  %v58 = vunpack.c.l.b16 %v24
  %v59 = vunpack.c.l.b16 %v25
  %v60 = vunpack.c.l.b16 %v26
  %v61 = vunpack.c.l.b16 %v27
  %v62 = vunpack.c.l.b16 %v28
  %v63 = vunpack.c.l.b16 %v29
  %v64 = vunpack.c.l.b16 %v30
  %v65 = vunpack.c.l.b16 %v31
  %v66 = vunpack.c.l.b16 %v32
  %v67 = vunpack.c.l.b16 %v33
  %v68 = vpack.c.b16 %v53, %v52
  %v69 = vpack.c.b16 %v55, %v54
  %v70 = vpack.c.b16 %v57, %v56
  %v71 = vpack.c.b16 %v59, %v58
  %v72 = vpack.c.b16 %v61, %v60
  %v73 = vpack.c.b16 %v63, %v62
  %v74 = vpack.c.b16 %v65, %v64
  %v75 = vpack.c.b16 %v67, %v66
  %v78 = vunpack.c.l.b16 %v34
  %v79 = vunpack.c.l.b16 %v35
  %v80 = vpack.c.b16 %v79, %v78
  %vm82 = vcmask 130048
  %v84 = vsel %vm82, %v68, 0
  %v87 = vsel %vm82, %v69, 0
  %v90 = vsel %vm82, %v70, 0
  %v93 = vsel %vm82, %v71, 0
  %v96 = vsel %vm82, %v72, 0
  %v99 = vsel %vm82, %v73, 0
  %v102 = vsel %vm82, %v74, 0
  %v105 = vsel %vm82, %v75, 0
  %107 = vmatpush.bf16.msra.mxu0 0
  %108 = vmatpush.bf16.msra.mxu0 0
  %109 = vmatpush.bf16.msra.mxu0 0
  %110 = vmatpush.bf16.msra.mxu0 0
  %111 = vmatpush.bf16.msra.mxu0 0
  %112 = vmatpush.bf16.msra.mxu0 0
  %113 = vmatpush.bf16.msra.mxu0 0
  %114 = vmatpush.bf16.msra.mxu0 %v80
  %115 = vmatmul.bf16.gmra.mxu0 %v84
  %v116 = vpop.f32.mrf.mxu0
  %v117 = vadd.f32 0.0, %v116
  %v118 = vpop.f32.mrf.mxu0
  %v119 = vadd.f32 0.0, %v118
  %120 = vmatmul.bf16.gmra.mxu0 %v87
  %v121 = vpop.f32.mrf.mxu0
  %v122 = vadd.f32 0.0, %v121
  %v123 = vpop.f32.mrf.mxu0
  %v124 = vadd.f32 0.0, %v123
  %125 = vmatmul.bf16.gmra.mxu0 %v90
  %v126 = vpop.f32.mrf.mxu0
  %v127 = vadd.f32 0.0, %v126
  %v128 = vpop.f32.mrf.mxu0
  %v129 = vadd.f32 0.0, %v128
  %130 = vmatmul.bf16.gmra.mxu0 %v93
  %v131 = vpop.f32.mrf.mxu0
  %v132 = vadd.f32 0.0, %v131
  %v133 = vpop.f32.mrf.mxu0
  %v134 = vadd.f32 0.0, %v133
  %135 = vmatmul.bf16.gmra.mxu0 %v96
  %v136 = vpop.f32.mrf.mxu0
  %v137 = vadd.f32 0.0, %v136
  %v138 = vpop.f32.mrf.mxu0
  %v139 = vadd.f32 0.0, %v138
  %140 = vmatmul.bf16.gmra.mxu0 %v99
  %v141 = vpop.f32.mrf.mxu0
  %v142 = vadd.f32 0.0, %v141
  %v143 = vpop.f32.mrf.mxu0
  %v144 = vadd.f32 0.0, %v143
  %145 = vmatmul.bf16.gmra.mxu0 %v102
  %v146 = vpop.f32.mrf.mxu0
  %v147 = vadd.f32 0.0, %v146
  %v148 = vpop.f32.mrf.mxu0
  %v149 = vadd.f32 0.0, %v148
  %150 = vmatmul.bf16.gmra.mxu0 %v105
  %v151 = vpop.f32.mrf.mxu0
  %v152 = vadd.f32 0.0, %v151
  %v153 = vpop.f32.mrf.mxu0
  %v154 = vadd.f32 0.0, %v153
  %155 = vdwg.mxu0
  %v156 = vld [vmem:[%s2] sm:$0x1]
  %v158 = vperm.slane %v156, 0
  %v160 = vmul.f32 %v117, %v158
  %v161 = vmul.f32 %v119, %v158
  %v162 = vmul.f32 %v122, %v158
  %v163 = vmul.f32 %v124, %v158
  %v164 = vmul.f32 %v127, %v158
  %v165 = vmul.f32 %v129, %v158
  %v166 = vmul.f32 %v132, %v158
  %v167 = vmul.f32 %v134, %v158
  %v168 = vmul.f32 %v137, %v158
  %v169 = vmul.f32 %v139, %v158
  %v170 = vmul.f32 %v142, %v158
  %v171 = vmul.f32 %v144, %v158
  %v172 = vmul.f32 %v147, %v158
  %v173 = vmul.f32 %v149, %v158
  %v174 = vmul.f32 %v152, %v158
  %v175 = vmul.f32 %v154, %v158
  %v176 = vld [vmem:[%s3] sm:$0x1]
  %v178 = vperm.slane %v176, 0
  %v180 = vadd.f32 %v160, %v178
  %v181 = vadd.f32 %v161, %v178
  %v182 = vadd.f32 %v162, %v178
  %v183 = vadd.f32 %v163, %v178
  %v184 = vadd.f32 %v164, %v178
  %v185 = vadd.f32 %v165, %v178
  %v186 = vadd.f32 %v166, %v178
  %v187 = vadd.f32 %v167, %v178
  %v188 = vadd.f32 %v168, %v178
  %v189 = vadd.f32 %v169, %v178
  %v190 = vadd.f32 %v170, %v178
  %v191 = vadd.f32 %v171, %v178
  %v192 = vadd.f32 %v172, %v178
  %v193 = vadd.f32 %v173, %v178
  %v194 = vadd.f32 %v174, %v178
  %v195 = vadd.f32 %v175, %v178
  %v196 = vmax.f32 %v180, 0.0
  %v197 = vmax.f32 %v181, 0.0
  %v198 = vmax.f32 %v182, 0.0
  %v199 = vmax.f32 %v183, 0.0
  %v200 = vmax.f32 %v184, 0.0
  %v201 = vmax.f32 %v185, 0.0
  %v202 = vmax.f32 %v186, 0.0
  %v203 = vmax.f32 %v187, 0.0
  %v204 = vmax.f32 %v188, 0.0
  %v205 = vmax.f32 %v189, 0.0
  %v206 = vmax.f32 %v190, 0.0
  %v207 = vmax.f32 %v191, 0.0
  %v208 = vmax.f32 %v192, 0.0
  %v209 = vmax.f32 %v193, 0.0
  %v210 = vmax.f32 %v194, 0.0
  %v211 = vmax.f32 %v195, 0.0
  %212 = vst [vmem:[%s4] sm:$0xff] %v196
  %213 = vst [vmem:[%s4 + $0x8] sm:$0xff] %v197
  %214 = vst [vmem:[%s4 + $0x10] sm:$0xff] %v198
  %215 = vst [vmem:[%s4 + $0x18] sm:$0xff] %v199
  %216 = vst [vmem:[%s4 + $0x20] sm:$0xff] %v200
  %217 = vst [vmem:[%s4 + $0x28] sm:$0xff] %v201
  %218 = vst [vmem:[%s4 + $0x30] sm:$0xff] %v202
  %219 = vst [vmem:[%s4 + $0x38] sm:$0xff] %v203
  %220 = vst [vmem:[%s4 + $0x40] sm:$0xff] %v204
  %221 = vst [vmem:[%s4 + $0x48] sm:$0xff] %v205
  %222 = vst [vmem:[%s4 + $0x50] sm:$0xff] %v206
  %223 = vst [vmem:[%s4 + $0x58] sm:$0xff] %v207
  %224 = vst [vmem:[%s4 + $0x60] sm:$0xff] %v208
  %225 = vst [vmem:[%s4 + $0x68] sm:$0xff] %v209
  %226 = vst [vmem:[%s4 + $0x70] sm:$0xff] %v210
  %227 = vst [vmem:[%s4 + $0x78] sm:$0xff] %v211
  // Predicated region
  $region18: #{_lambda_.7} parent=0 // pred_check
    _
  $region19: #{_lambda_.7} parent=0 // pred_check_branch
    %229 = sbr.rel (0) target = $region21
  $region20: #{_lambda_.7} parent=0 // pred_region
    _
  $region21: #{_lambda_.7} parent=0 // pred_fallthru
    _
  // Predicated region
  $region22: #{_lambda_.7} parent=0 // pred_check
    _
  $region23: #{_lambda_.7} parent=0 // pred_check_branch
    %231 = sbr.rel (0) target = $region25
  $region24: #{_lambda_.7} parent=0 // pred_region
    _
  $region25: #{_lambda_.7} parent=0 // pred_fallthru
    _

// kernel: _lambda_.8
$region0: #{_lambda_.8}
  #allocation0 [shape = 'u32[]', space=smem, size = 0x4, offset = 0x4, fixed_abs, tag = 'smem constant byte address 0x4 - core index']
  #allocation1 [shape = 'u32[72,128]{1,0:T(1,128)}', space=vmem, size = 0x9000, scoped, tag = 'internal scratch']
  %s0 = inlined_call_operand.vmem [shape: f32[2,9,72], index: 0, kind: input, shape index: {}]
  %s1 = inlined_call_operand.vmem [shape: f32[2,8,64], index: 1, kind: output, shape index: {}]
  %s2 = sld [smem:[#allocation0]]
  $region37: #{_lambda_.8} parent=0
    _
  %s4 = ssub.s32 1, %s2
  %s5 = scalar_select 0, %s4, %s2
  loop: start=0, step=1, limit=4
  $region2: #{_lambda_.8} parent=0 // loop_pre_header
    _
  $region3: #{_lambda_.8} parent=0 // loop_header
    %s7 = sphi 0, %s11
    %p8 = scmp.ge.s32.totalorder %s7, 4
    %s17 = sphi 0, %s19
    %s20 = sphi 0, %s17
    %s21 = sphi 0, %s20
    %s37 = sphi 0, %s21
    %s43 = sphi 0, %s45
    %s46 = sphi 0, %s43
    %s47 = sphi 0, %s46
    %s63 = sphi 0, %s47
  $region4: #{_lambda_.8} parent=0 // loop_header_branch
    %10 = sbr.rel (%p8) target = $region8
  $region5: #{_lambda_.8} parent=0 // loop_body
    %s12 = ssub.s32 %s7, 1
    %s13 = ssub.s32 %s7, 2
    %s14 = sadd.s32 %s7, 1
    %s15 = ssub.s32 %s7, %s14
    %p16 = scmp.eq.s32.totalorder %s15, 0
    %s18 = sadd.s32 %s17, 1
    %s19 = scalar_select %p16, %s17, %s18
    %p22 = pneg %p16
    %p23 = scmp.eq.s32.totalorder %s7, 1
    %p24 = por %p22, %p23
    %p25 = scmp.ne.s32.totalorder %s17, %s20
    %p26 = scmp.eq.s32.totalorder %s7, 0
    %p27 = por %p25, %p26
    %p28 = scmp.ne.s32.totalorder %s17, %s20
    %p29 = scmp.eq.s32.totalorder %s12, 1
    %p30 = por %p28, %p29
    %p31 = scmp.ne.s32.totalorder %s20, %s21
    %p32 = scmp.eq.s32.totalorder %s12, 0
    %p33 = por %p31, %p32
    %p34 = scmp.ne.s32.totalorder %s20, %s21
    %p35 = scmp.eq.s32.totalorder %s13, 1
    %p36 = por %p34, %p35
    %p38 = scmp.ne.s32.totalorder %s21, %s37
    %p39 = scmp.eq.s32.totalorder %s13, 0
    %p40 = por %p38, %p39
    %s41 = ssub.s32 %s7, %s14
    %p42 = scmp.eq.s32.totalorder %s41, 0
    %s44 = sadd.s32 %s43, 1
    %s45 = scalar_select %p42, %s43, %s44
    %p48 = pneg %p42
    %p49 = scmp.eq.s32.totalorder %s7, 1
    %p50 = por %p48, %p49
    %p51 = scmp.ne.s32.totalorder %s43, %s46
    %p52 = scmp.eq.s32.totalorder %s7, 0
    %p53 = por %p51, %p52
    %p54 = scmp.ne.s32.totalorder %s43, %s46
    %p55 = scmp.eq.s32.totalorder %s12, 1
    %p56 = por %p54, %p55
    %p57 = scmp.ne.s32.totalorder %s46, %s47
    %p58 = scmp.eq.s32.totalorder %s12, 0
    %p59 = por %p57, %p58
    %p60 = scmp.ne.s32.totalorder %s46, %s47
    %p61 = scmp.eq.s32.totalorder %s13, 1
    %p62 = por %p60, %p61
    %p64 = scmp.ne.s32.totalorder %s47, %s63
    %p65 = scmp.eq.s32.totalorder %s13, 0
    %p66 = por %p64, %p65
    %p67 = scmp.le.s32.totalorder 1, %s7
    %p68 = scmp.lt.s32.totalorder %s7, 3
    %p69 = pnand %p67, %p68
    %p70 = pneg %p69
    // Predicated region
    $region9: #{_lambda_.8} parent=5 // pred_check
      _
    $region10: #{_lambda_.8} parent=5 // pred_check_branch
      %72 = sbr.rel (%p69) target = $region12
    $region11: #{_lambda_.8} parent=5 // pred_region
      %s73 = ssub.s32 %s7, 1
    $region12: #{_lambda_.8} parent=5 // pred_fallthru
      _
    %p74 = scmp.lt.s32.totalorder %s7, 2
    // Predicated region
    $region13: #{_lambda_.8} parent=5 // pred_check
      %p75 = pneg %p74
    $region14: #{_lambda_.8} parent=5 // pred_check_branch
      %77 = sbr.rel (%p75) target = $region16
    $region15: #{_lambda_.8} parent=5 // pred_region
      // Predicated region
      $region17: #{_lambda_.8} parent=15 // pred_check
        %p78 = pneg %p27
      $region18: #{_lambda_.8} parent=15 // pred_check_branch
        %80 = sbr.rel (%p78) target = $region20
      $region19: #{_lambda_.8} parent=15 // pred_region
        %p81 = scmp.lt.s32.totalorder %s7, 1
        %s82 = scalar_select %p81, %s7, 1
        %s83 = smul.addr %s82, 2
        %s84 = smul.addr %s83, 8
        %s85 = scalar_lea.vmem %s0, %s84
      $region20: #{_lambda_.8} parent=15 // pred_fallthru
        _
    $region16: #{_lambda_.8} parent=5 // pred_fallthru
      _
    %p86 = scmp.le.s32.totalorder 1, %s7
    %p87 = scmp.lt.s32.totalorder %s7, 3
    %p88 = pnand %p86, %p87
    %p89 = pneg %p88
    // Predicated region
    $region21: #{_lambda_.8} parent=5 // pred_check
      _
    $region22: #{_lambda_.8} parent=5 // pred_check_branch
      %91 = sbr.rel (%p88) target = $region24
    $region23: #{_lambda_.8} parent=5 // pred_region
      %s92 = ssub.s32 %s7, 1
      %p93 = scmp.lt.s32.totalorder %s12, 1
      %s94 = scalar_select %p93, %s12, 1
      %s95 = smul.addr %s94, 2
      %s96 = smul.addr %s95, 8
      %s97 = scalar_lea.vmem %s0, %s96
      %p98 = pneg %p33
      %p99 = pneg %p30
      %p100 = pneg %p59
      %p101 = pneg %p56
      %p102 = scmp.lt.s32.totalorder %s12, 1
      %s103 = scalar_select %p102, %s12, 1
      %s104 = smul.addr %s103, 8
      %s105 = scalar_lea.vmem %s1, %s104
      %p106 = scmp.lt.s32.totalorder %s12, 1
      %s107 = scalar_select %p106, %s12, 1
      %s108 = smul.addr %s107, 2
      %s109 = smul.addr %s108, 8
      %s110 = scalar_lea.vmem %s0, %s109
      %p111 = scmp.lt.s32.totalorder %s12, 1
      %s112 = scalar_select %p111, %s12, 1
      %s113 = smul.addr %s112, 8
      %s114 = scalar_lea.vmem %s1, %s113
      %v115 = vld [vmem:[%s110] sm:$0xff]
      %v116 = vld [vmem:[%s110 + $0x1] sm:$0xff]
      %118 = vrot.lane.b32.xlu0 %v115, 120
      %v119 = vpop.permute.xlu0 %118
      %v121 = vmax.f32 %v115, %v119
      %123 = vrot.lane.b32.xlu0 %v116, 120
      %v124 = vpop.permute.xlu0 %123
      %v126 = vmax.f32 %v116, %v124
      %v127 = vmax.f32 %v121, %v126
      %vm128 = vcmask 523264
      %129 = vst.msk [vmem:[%s114] sm:$0xff] %vm128, %v127
      %p130 = scmp.lt.s32.totalorder %s12, 1
      %s131 = scalar_select %p130, %s12, 1
      %s132 = smul.addr %s131, 8
      %s133 = scalar_lea.vmem %s1, %s132
      // Predicated region
      $region25: #{_lambda_.8} parent=23 // pred_check
        %p134 = pneg %p56
      $region26: #{_lambda_.8} parent=23 // pred_check_branch
        %136 = sbr.rel (%p134) target = $region28
      $region27: #{_lambda_.8} parent=23 // pred_region
        _
      $region28: #{_lambda_.8} parent=23 // pred_fallthru
        _
    $region24: #{_lambda_.8} parent=5 // pred_fallthru
      _
    %p137 = scmp.le.s32.totalorder 2, %s7
    // Predicated region
    $region29: #{_lambda_.8} parent=5 // pred_check
      %p138 = pneg %p137
    $region30: #{_lambda_.8} parent=5 // pred_check_branch
      %140 = sbr.rel (%p138) target = $region32
    $region31: #{_lambda_.8} parent=5 // pred_region
      %s141 = ssub.s32 %s7, 2
      // Predicated region
      $region33: #{_lambda_.8} parent=31 // pred_check
        %p142 = pneg %p62
      $region34: #{_lambda_.8} parent=31 // pred_check_branch
        %144 = sbr.rel (%p142) target = $region36
      $region35: #{_lambda_.8} parent=31 // pred_region
        %p145 = scmp.lt.s32.totalorder %s13, 1
        %s146 = scalar_select %p145, %s13, 1
        %s147 = smul.addr %s146, 8
        %s148 = scalar_lea.vmem %s1, %s147
      $region36: #{_lambda_.8} parent=31 // pred_fallthru
        _
    $region32: #{_lambda_.8} parent=5 // pred_fallthru
      _
  $region6: #{_lambda_.8} parent=0 // loop_footer
    %s11 = sadd.s32 1, %s7
  $region7: #{_lambda_.8} parent=0 // loop_footer_branch
    %6 = sbr.rel target = $region3
  $region8: #{_lambda_.8} parent=0 // loop_exit
    _

// kernel: _lambda_.9
$region0: #{_lambda_.9}
  #allocation0 [shape = 'u32[]', space=smem, size = 0x4, offset = 0x4, fixed_abs, tag = 'smem constant byte address 0x4 - core index']
  #allocation1 [shape = 'u32[72,128]{1,0:T(1,128)}', space=vmem, size = 0x9000, scoped, tag = 'internal scratch']
  %s0 = inlined_call_operand.vmem [shape: bf16[32,144], index: 0, kind: input, shape index: {}]
  %s1 = inlined_call_operand.vmem [shape: bf16[144,128], index: 1, kind: input, shape index: {}]
  %s2 = inlined_call_operand.vmem [shape: f32[1,128], index: 2, kind: input, shape index: {}]
  %s3 = inlined_call_operand.vmem [shape: f32[1,128], index: 3, kind: input, shape index: {}]
  %s4 = inlined_call_operand.vmem [shape: bf16[128,128], index: 4, kind: input, shape index: {}]
  %s5 = inlined_call_operand.vmem [shape: f32[1,128], index: 5, kind: input, shape index: {}]
  %s6 = inlined_call_operand.vmem [shape: f32[1,128], index: 6, kind: input, shape index: {}]
  %s7 = inlined_call_operand.hbm [shape: f32[32,128], index: 7, kind: output, shape index: {}]
  %s8 = sld [smem:[#allocation0]]
  $region38: #{_lambda_.9} parent=0
    _
  %s10 = ssub.s32 1, %s8
  %s11 = scalar_select 0, %s10, %s8
  $region1: #{_lambda_.9} parent=0
    #allocation2 [shape = 'u8[16384]{0}', space=vmem, size = 0x4000, scoped, tag = 'output window, operand 0, single buffered']
    #allocation3 [shape = 's32[1]{0}', space=sflag, size = 0x4, scoped, tag = 'scoped memory for _lambda_.9']
    %12 = vsyncpa [#allocation3], 0
    // Predicated region
    $region2: #{_lambda_.9} parent=1 // pred_check
      _
    $region3: #{_lambda_.9} parent=1 // pred_check_branch
      %14 = sbr.rel (0) target = $region5
    $region4: #{_lambda_.9} parent=1 // pred_region
      _
    $region5: #{_lambda_.9} parent=1 // pred_fallthru
      _
    // Predicated region
    $region6: #{_lambda_.9} parent=1 // pred_check
      _
    $region7: #{_lambda_.9} parent=1 // pred_check_branch
      %16 = sbr.rel (0) target = $region9
    $region8: #{_lambda_.9} parent=1 // pred_region
      _
    $region9: #{_lambda_.9} parent=1 // pred_fallthru
      _
    // Predicated region
    $region10: #{_lambda_.9} parent=1 // pred_check
      _
    $region11: #{_lambda_.9} parent=1 // pred_check_branch
      %18 = sbr.rel (0) target = $region13
    $region12: #{_lambda_.9} parent=1 // pred_region
      _
    $region13: #{_lambda_.9} parent=1 // pred_fallthru
      _
    // Predicated region
    $region14: #{_lambda_.9} parent=1 // pred_check
      _
    $region15: #{_lambda_.9} parent=1 // pred_check_branch
      %20 = sbr.rel (0) target = $region17
    $region16: #{_lambda_.9} parent=1 // pred_region
      _
    $region17: #{_lambda_.9} parent=1 // pred_fallthru
      _
    // Predicated region
    $region18: #{_lambda_.9} parent=1 // pred_check
      _
    $region19: #{_lambda_.9} parent=1 // pred_check_branch
      %22 = sbr.rel (0) target = $region21
    $region20: #{_lambda_.9} parent=1 // pred_region
      _
    $region21: #{_lambda_.9} parent=1 // pred_fallthru
      _
    // Predicated region
    $region22: #{_lambda_.9} parent=1 // pred_check
      _
    $region23: #{_lambda_.9} parent=1 // pred_check_branch
      %24 = sbr.rel (0) target = $region25
    $region24: #{_lambda_.9} parent=1 // pred_region
      _
    $region25: #{_lambda_.9} parent=1 // pred_fallthru
      _
    // Predicated region
    $region26: #{_lambda_.9} parent=1 // pred_check
      _
    $region27: #{_lambda_.9} parent=1 // pred_check_branch
      %26 = sbr.rel (0) target = $region29
    $region28: #{_lambda_.9} parent=1 // pred_region
      _
    $region29: #{_lambda_.9} parent=1 // pred_fallthru
      _
    %v28 = vld [vmem:[%s0] sm:$0xff]
    %v29 = vld [vmem:[%s0 + $0x8] sm:$0xff]
    %v30 = vld [vmem:[%s0 + $0x10] sm:$0xff]
    %v31 = vld [vmem:[%s0 + $0x18] sm:$0xff]
    %v32 = vld [vmem:[%s1] sm:$0xf]
    %v33 = vld [vmem:[%s1 + $0x4] sm:$0xf]
    %v34 = vld [vmem:[%s1 + $0x8] sm:$0xf]
    %v35 = vld [vmem:[%s1 + $0xc] sm:$0xf]
    %v36 = vld [vmem:[%s1 + $0x10] sm:$0xf]
    %v37 = vld [vmem:[%s1 + $0x14] sm:$0xf]
    %v38 = vld [vmem:[%s1 + $0x18] sm:$0xf]
    %v39 = vld [vmem:[%s1 + $0x1c] sm:$0xf]
    %v40 = vld [vmem:[%s1 + $0x20] sm:$0xf]
    %v41 = vld [vmem:[%s1 + $0x24] sm:$0xf]
    %v42 = vld [vmem:[%s1 + $0x28] sm:$0xf]
    %v43 = vld [vmem:[%s1 + $0x2c] sm:$0xf]
    %v44 = vld [vmem:[%s1 + $0x30] sm:$0xf]
    %v45 = vld [vmem:[%s1 + $0x34] sm:$0xf]
    %v46 = vld [vmem:[%s1 + $0x38] sm:$0xf]
    %v47 = vld [vmem:[%s1 + $0x3c] sm:$0xf]
    %v48 = vld [vmem:[%s1 + $0x40] sm:$0xf]
    %v49 = vld [vmem:[%s1 + $0x44] sm:$0xf]
    %v54 = vunpack.c.l.b16 %v28
    %v55 = vunpack.c.h.b16 %v28
    %v56 = vunpack.c.l.b16 %v29
    %v57 = vunpack.c.h.b16 %v29
    %v58 = vunpack.c.l.b16 %v30
    %v59 = vunpack.c.h.b16 %v30
    %v60 = vunpack.c.l.b16 %v31
    %v61 = vunpack.c.h.b16 %v31
    %v62 = vpack.c.b16 %v56, %v54
    %v63 = vpack.c.b16 %v57, %v55
    %v64 = vpack.c.b16 %v60, %v58
    %v65 = vpack.c.b16 %v61, %v59
    %v86 = vunpack.c.l.b16 %v32
    %v87 = vunpack.c.l.b16 %v33
    %v88 = vunpack.c.l.b16 %v34
    %v89 = vunpack.c.l.b16 %v35
    %v90 = vunpack.c.l.b16 %v36
    %v91 = vunpack.c.l.b16 %v37
    %v92 = vunpack.c.l.b16 %v38
    %v93 = vunpack.c.l.b16 %v39
    %v94 = vunpack.c.l.b16 %v40
    %v95 = vunpack.c.l.b16 %v41
    %v96 = vunpack.c.l.b16 %v42
    %v97 = vunpack.c.l.b16 %v43
    %v98 = vunpack.c.l.b16 %v44
    %v99 = vunpack.c.l.b16 %v45
    %v100 = vunpack.c.l.b16 %v46
    %v101 = vunpack.c.l.b16 %v47
    %v102 = vunpack.c.l.b16 %v48
    %v103 = vunpack.c.l.b16 %v49
    %v104 = vpack.c.b16 %v87, %v86
    %v105 = vpack.c.b16 %v89, %v88
    %v106 = vpack.c.b16 %v91, %v90
    %v107 = vpack.c.b16 %v93, %v92
    %v108 = vpack.c.b16 %v95, %v94
    %v109 = vpack.c.b16 %v97, %v96
    %v110 = vpack.c.b16 %v99, %v98
    %v111 = vpack.c.b16 %v101, %v100
    %v112 = vpack.c.b16 %v103, %v102
    %vm122 = vcmask 130048
    %v124 = vsel %vm122, %v63, 0
    %v127 = vsel %vm122, %v65, 0
    %129 = vmatpush.bf16.msra.mxu0 %v111
    %130 = vmatpush.bf16.msra.mxu0 %v110
    %131 = vmatpush.bf16.msra.mxu0 %v109
    %132 = vmatpush.bf16.msra.mxu0 %v108
    %133 = vmatpush.bf16.msra.mxu0 %v107
    %134 = vmatpush.bf16.msra.mxu0 %v106
    %135 = vmatpush.bf16.msra.mxu0 %v105
    %136 = vmatpush.bf16.msra.mxu0 %v104
    %137 = vmatmul.bf16.gmra.mxu0 %v62
    %v138 = vpop.f32.mrf.mxu0
    %v139 = vadd.f32 0.0, %v138
    %v140 = vpop.f32.mrf.mxu0
    %v141 = vadd.f32 0.0, %v140
    %142 = vmatmul.bf16.gmra.mxu0 %v64
    %v143 = vpop.f32.mrf.mxu0
    %v144 = vadd.f32 0.0, %v143
    %v145 = vpop.f32.mrf.mxu0
    %v146 = vadd.f32 0.0, %v145
    %147 = vdwg.mxu0
    %148 = vmatpush.bf16.msra.mxu0 0
    %149 = vmatpush.bf16.msra.mxu0 0
    %150 = vmatpush.bf16.msra.mxu0 0
    %151 = vmatpush.bf16.msra.mxu0 0
    %152 = vmatpush.bf16.msra.mxu0 0
    %153 = vmatpush.bf16.msra.mxu0 0
    %154 = vmatpush.bf16.msra.mxu0 0
    %155 = vmatpush.bf16.msra.mxu0 %v112
    %156 = vmatmul.bf16.gmra.mxu0 %v124
    %v157 = vpop.f32.mrf.mxu0
    %v158 = vadd.f32 %v139, %v157
    %v159 = vpop.f32.mrf.mxu0
    %v160 = vadd.f32 %v141, %v159
    %161 = vmatmul.bf16.gmra.mxu0 %v127
    %v162 = vpop.f32.mrf.mxu0
    %v163 = vadd.f32 %v144, %v162
    %v164 = vpop.f32.mrf.mxu0
    %v165 = vadd.f32 %v146, %v164
    %166 = vdwg.mxu0
    %v167 = vld [vmem:[%s2] sm:$0x1]
    %v169 = vperm.slane %v167, 0
    %v171 = vmul.f32 %v158, %v169
    %v172 = vmul.f32 %v160, %v169
    %v173 = vmul.f32 %v163, %v169
    %v174 = vmul.f32 %v165, %v169
    %v175 = vld [vmem:[%s3] sm:$0x1]
    %v177 = vperm.slane %v175, 0
    %v179 = vadd.f32 %v171, %v177
    %v180 = vadd.f32 %v172, %v177
    %v181 = vadd.f32 %v173, %v177
    %v182 = vadd.f32 %v174, %v177
    %v183 = vmax.f32 %v179, 0.0
    %v184 = vmax.f32 %v180, 0.0
    %v185 = vmax.f32 %v181, 0.0
    %v186 = vmax.f32 %v182, 0.0
    %v187 = vpack.c.bf16 %v184, %v183
    %v188 = vpack.c.bf16 %v186, %v185
    %v189 = vld [vmem:[%s4] sm:$0xf]
    %v190 = vld [vmem:[%s4 + $0x4] sm:$0xf]
    %v191 = vld [vmem:[%s4 + $0x8] sm:$0xf]
    %v192 = vld [vmem:[%s4 + $0xc] sm:$0xf]
    %v193 = vld [vmem:[%s4 + $0x10] sm:$0xf]
    %v194 = vld [vmem:[%s4 + $0x14] sm:$0xf]
    %v195 = vld [vmem:[%s4 + $0x18] sm:$0xf]
    %v196 = vld [vmem:[%s4 + $0x1c] sm:$0xf]
    %v197 = vld [vmem:[%s4 + $0x20] sm:$0xf]
    %v198 = vld [vmem:[%s4 + $0x24] sm:$0xf]
    %v199 = vld [vmem:[%s4 + $0x28] sm:$0xf]
    %v200 = vld [vmem:[%s4 + $0x2c] sm:$0xf]
    %v201 = vld [vmem:[%s4 + $0x30] sm:$0xf]
    %v202 = vld [vmem:[%s4 + $0x34] sm:$0xf]
    %v203 = vld [vmem:[%s4 + $0x38] sm:$0xf]
    %v204 = vld [vmem:[%s4 + $0x3c] sm:$0xf]
    %v221 = vunpack.c.l.b16 %v189
    %v222 = vunpack.c.l.b16 %v190
    %v223 = vunpack.c.l.b16 %v191
    %v224 = vunpack.c.l.b16 %v192
    %v225 = vunpack.c.l.b16 %v193
    %v226 = vunpack.c.l.b16 %v194
    %v227 = vunpack.c.l.b16 %v195
    %v228 = vunpack.c.l.b16 %v196
    %v229 = vunpack.c.l.b16 %v197
    %v230 = vunpack.c.l.b16 %v198
    %v231 = vunpack.c.l.b16 %v199
    %v232 = vunpack.c.l.b16 %v200
    %v233 = vunpack.c.l.b16 %v201
    %v234 = vunpack.c.l.b16 %v202
    %v235 = vunpack.c.l.b16 %v203
    %v236 = vunpack.c.l.b16 %v204
    %v237 = vpack.c.b16 %v222, %v221
    %v238 = vpack.c.b16 %v224, %v223
    %v239 = vpack.c.b16 %v226, %v225
    %v240 = vpack.c.b16 %v228, %v227
    %v241 = vpack.c.b16 %v230, %v229
    %v242 = vpack.c.b16 %v232, %v231
    %v243 = vpack.c.b16 %v234, %v233
    %v244 = vpack.c.b16 %v236, %v235
    %253 = vmatpush.bf16.msra.mxu0 %v244
    %254 = vmatpush.bf16.msra.mxu0 %v243
    %255 = vmatpush.bf16.msra.mxu0 %v242
    %256 = vmatpush.bf16.msra.mxu0 %v241
    %257 = vmatpush.bf16.msra.mxu0 %v240
    %258 = vmatpush.bf16.msra.mxu0 %v239
    %259 = vmatpush.bf16.msra.mxu0 %v238
    %260 = vmatpush.bf16.msra.mxu0 %v237
    %261 = vmatmul.bf16.gmra.mxu0 %v187
    %v262 = vpop.f32.mrf.mxu0
    %v263 = vadd.f32 0.0, %v262
    %v264 = vpop.f32.mrf.mxu0
    %v265 = vadd.f32 0.0, %v264
    %266 = vmatmul.bf16.gmra.mxu0 %v188
    %v267 = vpop.f32.mrf.mxu0
    %v268 = vadd.f32 0.0, %v267
    %v269 = vpop.f32.mrf.mxu0
    %v270 = vadd.f32 0.0, %v269
    %271 = vdwg.mxu0
    %v272 = vld [vmem:[%s5] sm:$0x1]
    %v274 = vperm.slane %v272, 0
    %v276 = vmul.f32 %v263, %v274
    %v277 = vmul.f32 %v265, %v274
    %v278 = vmul.f32 %v268, %v274
    %v279 = vmul.f32 %v270, %v274
    %v280 = vld [vmem:[%s6] sm:$0x1]
    %v282 = vperm.slane %v280, 0
    %v284 = vadd.f32 %v276, %v282
    %v285 = vadd.f32 %v277, %v282
    %v286 = vadd.f32 %v278, %v282
    %v287 = vadd.f32 %v279, %v282
    %v288 = vmax.f32 %v284, 0.0
    %v289 = vmax.f32 %v285, 0.0
    %v290 = vmax.f32 %v286, 0.0
    %v291 = vmax.f32 %v287, 0.0
    %292 = vst [vmem:[#allocation2] sm:$0xff] %v288
    %293 = vst [vmem:[#allocation2 + $0x8] sm:$0xff] %v289
    %294 = vst [vmem:[#allocation2 + $0x10] sm:$0xff] %v290
    %295 = vst [vmem:[#allocation2 + $0x18] sm:$0xff] %v291
    // Predicated region
    $region30: #{_lambda_.9} parent=1 // pred_check
      _
    $region31: #{_lambda_.9} parent=1 // pred_check_branch
      %297 = sbr.rel (0) target = $region33
    $region32: #{_lambda_.9} parent=1 // pred_region
      %299 = vsyncadd [#allocation3], 0
      %s300 = sshll.u32 [#allocation2], 4
      %s301 = int_to_ptr.vmem [resolvable:$true] %s300
      %s302 = sshll.u32 %s7, 4
      %s303 = int_to_ptr.hbm [resolvable:$true] %s302
      %308 = dma.vmem_to_hbm [thread:$0]  %s301, 512, %s303, [#allocation3], 128, 128, 8
    $region33: #{_lambda_.9} parent=1 // pred_fallthru
      _
    // Predicated region
    $region34: #{_lambda_.9} parent=1 // pred_check
      _
    $region35: #{_lambda_.9} parent=1 // pred_check_branch
      %310 = sbr.rel (0) target = $region37
    $region36: #{_lambda_.9} parent=1 // pred_region
      %312 = dma.done [#allocation3], 512
    $region37: #{_lambda_.9} parent=1 // pred_fallthru
      _
    %313 = vsyncpa [#allocation3], 1

</llo_original>
